<compile_context>
chip_gen: v7x
topology: tpu7x:2x2x1
jax: 0.10.0
libtpu: 0.0.40
codegen_flags: <defaults>
</compile_context>

<pallas_src>
import jax
import jax.numpy as jnp
import numpy as np
from jax.experimental import pallas as pl
from jax.experimental.pallas import tpu as pltpu


# Largest M-tile (lane axis of the output). 180*4096*4B double-buffered ≈ 6 MB,
# comfortably inside the default scoped VMEM limit on v5e/v6e/v7x.
_TM_MAX = 4096


# --------------------------------------------------------------------------
# Pallas kernel: one (Cout, K) @ (K, TM) GEMM + bias + ReLU, lane-dense output
# --------------------------------------------------------------------------
def _gemm_bias_relu_kernel(w_ref, b_ref, x_ref, o_ref):
    acc = jnp.dot(w_ref[...], x_ref[...], preferred_element_type=jnp.float32)
    o_ref[...] = jnp.maximum(acc + b_ref[...], 0.0).astype(o_ref.dtype)


def conv2d_relu_pallas(x_cnhw, w_oihw, bias, *, stride, padding):
    """Conv2d(+bias)+ReLU.

    x_cnhw: (Cin, N, H, W)  — channels-first internal layout.
    w_oihw: (Cout, Cin, KH, KW) (PyTorch layout).
    Returns (Cout, N, Ho, Wo).
    """
    cin, N, H, W = x_cnhw.shape
    cout, cin_w, kh, kw = w_oihw.shape
    assert cin == cin_w
    ho = (H + 2 * padding - kh) // stride + 1
    wo = (W + 2 * padding - kw) // stride + 1
    M = N * ho * wo
    K = cin * kh * kw

    # ---- glue: build the transposed im2col slab (K, M), tap-major / chan-minor
    xp = jnp.pad(x_cnhw, ((0, 0), (0, 0),
                          (padding, padding), (padding, padding)))
    cols = []
    for dy in range(kh):
        for dx in range(kw):
            sl = xp[:, :,
                    dy:dy + stride * (ho - 1) + 1:stride,
                    dx:dx + stride * (wo - 1) + 1:stride]        # (Cin, N, Ho, Wo)
            cols.append(sl.reshape(cin, M))
    x_t = jnp.concatenate(cols, axis=0)                          # (K, M)

    # Weight folded to (Cout, K) with k = (dy*kw+dx)*cin + c  (matches x_t).
    w_t = jnp.transpose(w_oihw, (0, 2, 3, 1)).reshape(cout, K).astype(jnp.float32)
    if bias is None:
        bias = jnp.zeros((cout,), jnp.float32)
    b2d = bias.reshape(cout, 1).astype(jnp.float32)

    # ---- tiling: M on the lane axis; tile only if it would not fit VMEM ----
    TM = M if M <= _TM_MAX else _TM_MAX
    grid_m = pl.cdiv(M, TM)

    cost = pl.CostEstimate(
        flops=int(2 * M * K * cout),
        transcendentals=0,
        bytes_accessed=int(4 * (K * M + cout * K + cout * M)),
    )

    out_t = pl.pallas_call(
        _gemm_bias_relu_kernel,
        out_shape=jax.ShapeDtypeStruct((cout, M), jnp.float32),
        grid_spec=pltpu.PrefetchScalarGridSpec(
            num_scalar_prefetch=0,
            grid=(grid_m,),
            in_specs=[
                pl.BlockSpec((cout, K), lambda m: (0, 0)),   # resident weights
                pl.BlockSpec((cout, 1), lambda m: (0, 0)),   # resident bias
                pl.BlockSpec((K, TM), lambda m: (0, m)),     # im2col tile
            ],
            out_specs=pl.BlockSpec((cout, TM), lambda m: (0, m)),
        ),
        compiler_params=pltpu.CompilerParams(
            dimension_semantics=("parallel",)),
        cost_estimate=cost,
    )(w_t, b2d, x_t)

    return out_t.reshape(cout, N, ho, wo)


# --------------------------------------------------------------------------
# ContextExtractor parameters (deterministic synthetic init) and forward
# --------------------------------------------------------------------------
def init_params(key, input_dim=3, hidden=(16, 18, 20)):
    def conv_w(k, cout, cin, kh, kw):
        scale = 1.0 / np.sqrt(cin * kh * kw)
        return jax.random.normal(k, (cout, cin, kh, kw), jnp.float32) * scale

    ks = jax.random.split(key, 8)
    p = {}
    p["conv1_w"] = conv_w(ks[0], hidden[0], input_dim, 7, 7)
    p["conv1_b"] = jax.random.normal(ks[1], (hidden[0],), jnp.float32) * 0.1
    p["b1_w1"] = conv_w(ks[2], hidden[0], hidden[0], 3, 3)
    p["b1_w2"] = conv_w(ks[3], hidden[0], hidden[0], 3, 3)
    p["b2_w1"] = conv_w(ks[4], hidden[1], hidden[0], 3, 3)
    p["b2_w2"] = conv_w(ks[5], hidden[1], hidden[1], 3, 3)
    p["b3_w1"] = conv_w(ks[6], hidden[2], hidden[1], 3, 3)
    p["b3_w2"] = conv_w(ks[7], hidden[2], hidden[2], 3, 3)
    return p


def context_extractor_forward(params, x_nchw):
    # Public API is NCHW (PyTorch); compute in channels-first CNHW internally
    # so each layer's lane-dense (Cout, M) output feeds the next layer directly.
    x = jnp.transpose(x_nchw, (1, 0, 2, 3))                      # (C, N, H, W)
    x = conv2d_relu_pallas(x, params["conv1_w"], params["conv1_b"],
                           stride=1, padding=3)
    s1 = conv2d_relu_pallas(x, params["b1_w1"], None, stride=1, padding=1)
    s1 = conv2d_relu_pallas(s1, params["b1_w2"], None, stride=1, padding=1)
    s2 = conv2d_relu_pallas(s1, params["b2_w1"], None, stride=2, padding=1)
    s2 = conv2d_relu_pallas(s2, params["b2_w2"], None, stride=1, padding=1)
    s3 = conv2d_relu_pallas(s2, params["b3_w1"], None, stride=2, padding=1)
    s3 = conv2d_relu_pallas(s3, params["b3_w2"], None, stride=1, padding=1)
    to_nchw = lambda a: jnp.transpose(a, (1, 0, 2, 3))
    return [to_nchw(s1), to_nchw(s2), to_nchw(s3)]


# --------------------------------------------------------------------------
# Pure-JAX reference (for a correctness sanity check)
# --------------------------------------------------------------------------
def _ref_conv(x, w, b, stride, pad):
    y = jax.lax.conv_general_dilated(
        x, w, window_strides=(stride, stride),
        padding=[(pad, pad), (pad, pad)],
        dimension_numbers=("NCHW", "OIHW", "NCHW"))
    if b is not None:
        y = y + b[None, :, None, None]
    return jnp.maximum(y, 0.0)


def reference_forward(params, x):
    x = _ref_conv(x, params["conv1_w"], params["conv1_b"], 1, 3)
    s1 = _ref_conv(x, params["b1_w1"], None, 1, 1)
    s1 = _ref_conv(s1, params["b1_w2"], None, 1, 1)
    s2 = _ref_conv(s1, params["b2_w1"], None, 2, 1)
    s2 = _ref_conv(s2, params["b2_w2"], None, 1, 1)
    s3 = _ref_conv(s2, params["b3_w1"], None, 2, 1)
    s3 = _ref_conv(s3, params["b3_w2"], None, 1, 1)
    return [s1, s2, s3]


if __name__ == "__main__":
    key = jax.random.PRNGKey(0)
    k_param, k_x = jax.random.split(key)
    params = init_params(k_param)
    x = jax.random.normal(k_x, (2, 3, 16, 16), jnp.float32)   # NCHW, like PyTorch

    outs = jax.jit(context_extractor_forward)(params, x)
    outs = [jax.block_until_ready(o) for o in outs]

    assert outs[0].shape == (2, 16, 16, 16), outs[0].shape
    assert outs[1].shape == (2, 18, 8, 8), outs[1].shape
    assert outs[2].shape == (2, 20, 4, 4), outs[2].shape

    refs = jax.jit(reference_forward)(params, x)
    refs = [jax.block_until_ready(r) for r in refs]
    for o, r in zip(outs, refs):
        np.testing.assert_allclose(np.asarray(o), np.asarray(r),
                                   rtol=2e-2, atol=2e-2)

    print("KERNEL_OK")
</pallas_src>

<mosaic_0001>
module attributes {stable_mosaic.version = 11 : i64} {
  func.func @_gemm_bias_relu_kernel(%arg0: i32, %arg1: memref<16x147xf32, #tpu.memory_space<vmem>>, %arg2: memref<16x1xf32, #tpu.memory_space<vmem>>, %arg3: memref<147x512xf32, #tpu.memory_space<vmem>>, %arg4: memref<16x512xf32, #tpu.memory_space<vmem>>) attributes {dimension_semantics = [#tpu.dimension_semantics<parallel>], iteration_bounds = array<i64: 1>, scalar_prefetch = 0 : i64, scratch_operands = 0 : i64, tpu.core_type = #tpu.core_type<tc>, window_params = [{pipeline_mode = #tpu.pipeline_mode<synchronous>, transform_indices = @transform_0, window_bounds = array<i64: 16, 147>}, {pipeline_mode = #tpu.pipeline_mode<synchronous>, transform_indices = @transform_1, window_bounds = array<i64: 16, 1>}, {transform_indices = @transform_2, window_bounds = array<i64: 147, 512>}, {transform_indices = @transform_3, window_bounds = array<i64: 16, 512>}]} {
    %c0 = arith.constant 0 : index
    %c0_0 = arith.constant 0 : index
    %0 = vector.load %arg1[%c0, %c0_0] : memref<16x147xf32, #tpu.memory_space<vmem>>, vector<16x147xf32>
    %c0_1 = arith.constant 0 : index
    %c0_2 = arith.constant 0 : index
    %1 = vector.load %arg3[%c0_1, %c0_2] : memref<147x512xf32, #tpu.memory_space<vmem>>, vector<147x512xf32>
    %cst = arith.constant dense<0.000000e+00> : vector<16x512xf32>
    %2 = tpu.matmul %0, %1, %cst {dimension_numbers = #tpu.dot_dimension_numbers<[1], [0], [0], [1], [0, 0, 1, 1], [], []>} : vector<16x147xf32>, vector<147x512xf32>, vector<16x512xf32> -> vector<16x512xf32>
    %c0_3 = arith.constant 0 : index
    %c0_4 = arith.constant 0 : index
    %3 = vector.load %arg2[%c0_3, %c0_4] : memref<16x1xf32, #tpu.memory_space<vmem>>, vector<16x1xf32>
    %4 = vector.broadcast %3 : vector<16x1xf32> to vector<16x512xf32>
    %5 = arith.addf %2, %4 : vector<16x512xf32>
    %cst_5 = arith.constant 0.000000e+00 : f32
    %6 = vector.broadcast %cst_5 : f32 to vector<16x512xf32>
    %7 = arith.maximumf %5, %6 : vector<16x512xf32>
    %c0_6 = arith.constant 0 : index
    %c0_7 = arith.constant 0 : index
    %8 = vector.load %arg4[%c0_6, %c0_7] : memref<16x512xf32, #tpu.memory_space<vmem>>, vector<16x512xf32>
    tpu.vector_store %arg4[%c0_6, %c0_7], %7 {strides = array<i32>} : memref<16x512xf32, #tpu.memory_space<vmem>>, vector<16x512xf32>,
    return
  }
  func.func @transform_0(%arg0: i32) -> (i32, i32) {
    %c0_i32 = arith.constant 0 : i32
    %c0_i32_0 = arith.constant 0 : i32
    %c0_i32_1 = arith.constant 0 : i32
    return %c0_i32, %c0_i32_0 : i32, i32
  }
  func.func @transform_1(%arg0: i32) -> (i32, i32) {
    %c0_i32 = arith.constant 0 : i32
    %c0_i32_0 = arith.constant 0 : i32
    %c0_i32_1 = arith.constant 0 : i32
    return %c0_i32, %c0_i32_0 : i32, i32
  }
  func.func @transform_2(%arg0: i32) -> (i32, i32) {
    %c0_i32 = arith.constant 0 : i32
    %c0_i32_0 = arith.constant 0 : i32
    return %c0_i32, %arg0 : i32, i32
  }
  func.func @transform_3(%arg0: i32) -> (i32, i32) {
    %c0_i32 = arith.constant 0 : i32
    %c0_i32_0 = arith.constant 0 : i32
    return %c0_i32, %arg0 : i32, i32
  }
}

module attributes {stable_mosaic.version = 11 : i64} {
  func.func @_gemm_bias_relu_kernel(%arg0: i32, %arg1: memref<16x144xf32, #tpu.memory_space<vmem>>, %arg2: memref<16x1xf32, #tpu.memory_space<vmem>>, %arg3: memref<144x512xf32, #tpu.memory_space<vmem>>, %arg4: memref<16x512xf32, #tpu.memory_space<vmem>>) attributes {dimension_semantics = [#tpu.dimension_semantics<parallel>], iteration_bounds = array<i64: 1>, scalar_prefetch = 0 : i64, scratch_operands = 0 : i64, tpu.core_type = #tpu.core_type<tc>, window_params = [{pipeline_mode = #tpu.pipeline_mode<synchronous>, transform_indices = @transform_0, window_bounds = array<i64: 16, 144>}, {pipeline_mode = #tpu.pipeline_mode<synchronous>, transform_indices = @transform_1, window_bounds = array<i64: 16, 1>}, {transform_indices = @transform_2, window_bounds = array<i64: 144, 512>}, {transform_indices = @transform_3, window_bounds = array<i64: 16, 512>}]} {
    %c0 = arith.constant 0 : index
    %c0_0 = arith.constant 0 : index
    %0 = vector.load %arg1[%c0, %c0_0] : memref<16x144xf32, #tpu.memory_space<vmem>>, vector<16x144xf32>
    %c0_1 = arith.constant 0 : index
    %c0_2 = arith.constant 0 : index
    %1 = vector.load %arg3[%c0_1, %c0_2] : memref<144x512xf32, #tpu.memory_space<vmem>>, vector<144x512xf32>
    %cst = arith.constant dense<0.000000e+00> : vector<16x512xf32>
    %2 = tpu.matmul %0, %1, %cst {dimension_numbers = #tpu.dot_dimension_numbers<[1], [0], [0], [1], [0, 0, 1, 1], [], []>} : vector<16x144xf32>, vector<144x512xf32>, vector<16x512xf32> -> vector<16x512xf32>
    %c0_3 = arith.constant 0 : index
    %c0_4 = arith.constant 0 : index
    %3 = vector.load %arg2[%c0_3, %c0_4] : memref<16x1xf32, #tpu.memory_space<vmem>>, vector<16x1xf32>
    %4 = vector.broadcast %3 : vector<16x1xf32> to vector<16x512xf32>
    %5 = arith.addf %2, %4 : vector<16x512xf32>
    %cst_5 = arith.constant 0.000000e+00 : f32
    %6 = vector.broadcast %cst_5 : f32 to vector<16x512xf32>
    %7 = arith.maximumf %5, %6 : vector<16x512xf32>
    %c0_6 = arith.constant 0 : index
    %c0_7 = arith.constant 0 : index
    %8 = vector.load %arg4[%c0_6, %c0_7] : memref<16x512xf32, #tpu.memory_space<vmem>>, vector<16x512xf32>
    tpu.vector_store %arg4[%c0_6, %c0_7], %7 {strides = array<i32>} : memref<16x512xf32, #tpu.memory_space<vmem>>, vector<16x512xf32>,
    return
  }
  func.func @transform_0(%arg0: i32) -> (i32, i32) {
    %c0_i32 = arith.constant 0 : i32
    %c0_i32_0 = arith.constant 0 : i32
    %c0_i32_1 = arith.constant 0 : i32
    return %c0_i32, %c0_i32_0 : i32, i32
  }
  func.func @transform_1(%arg0: i32) -> (i32, i32) {
    %c0_i32 = arith.constant 0 : i32
    %c0_i32_0 = arith.constant 0 : i32
    %c0_i32_1 = arith.constant 0 : i32
    return %c0_i32, %c0_i32_0 : i32, i32
  }
  func.func @transform_2(%arg0: i32) -> (i32, i32) {
    %c0_i32 = arith.constant 0 : i32
    %c0_i32_0 = arith.constant 0 : i32
    return %c0_i32, %arg0 : i32, i32
  }
  func.func @transform_3(%arg0: i32) -> (i32, i32) {
    %c0_i32 = arith.constant 0 : i32
    %c0_i32_0 = arith.constant 0 : i32
    return %c0_i32, %arg0 : i32, i32
  }
}

module attributes {stable_mosaic.version = 11 : i64} {
  func.func @_gemm_bias_relu_kernel(%arg0: i32, %arg1: memref<18x144xf32, #tpu.memory_space<vmem>>, %arg2: memref<18x1xf32, #tpu.memory_space<vmem>>, %arg3: memref<144x128xf32, #tpu.memory_space<vmem>>, %arg4: memref<18x128xf32, #tpu.memory_space<vmem>>) attributes {dimension_semantics = [#tpu.dimension_semantics<parallel>], iteration_bounds = array<i64: 1>, scalar_prefetch = 0 : i64, scratch_operands = 0 : i64, tpu.core_type = #tpu.core_type<tc>, window_params = [{pipeline_mode = #tpu.pipeline_mode<synchronous>, transform_indices = @transform_0, window_bounds = array<i64: 18, 144>}, {pipeline_mode = #tpu.pipeline_mode<synchronous>, transform_indices = @transform_1, window_bounds = array<i64: 18, 1>}, {transform_indices = @transform_2, window_bounds = array<i64: 144, 128>}, {transform_indices = @transform_3, window_bounds = array<i64: 18, 128>}]} {
    %c0 = arith.constant 0 : index
    %c0_0 = arith.constant 0 : index
    %0 = vector.load %arg1[%c0, %c0_0] : memref<18x144xf32, #tpu.memory_space<vmem>>, vector<18x144xf32>
    %c0_1 = arith.constant 0 : index
    %c0_2 = arith.constant 0 : index
    %1 = vector.load %arg3[%c0_1, %c0_2] : memref<144x128xf32, #tpu.memory_space<vmem>>, vector<144x128xf32>
    %cst = arith.constant dense<0.000000e+00> : vector<18x128xf32>
    %2 = tpu.matmul %0, %1, %cst {dimension_numbers = #tpu.dot_dimension_numbers<[1], [0], [0], [1], [0, 0, 1, 1], [], []>} : vector<18x144xf32>, vector<144x128xf32>, vector<18x128xf32> -> vector<18x128xf32>
    %c0_3 = arith.constant 0 : index
    %c0_4 = arith.constant 0 : index
    %3 = vector.load %arg2[%c0_3, %c0_4] : memref<18x1xf32, #tpu.memory_space<vmem>>, vector<18x1xf32>
    %4 = vector.broadcast %3 : vector<18x1xf32> to vector<18x128xf32>
    %5 = arith.addf %2, %4 : vector<18x128xf32>
    %cst_5 = arith.constant 0.000000e+00 : f32
    %6 = vector.broadcast %cst_5 : f32 to vector<18x128xf32>
    %7 = arith.maximumf %5, %6 : vector<18x128xf32>
    %c0_6 = arith.constant 0 : index
    %c0_7 = arith.constant 0 : index
    %8 = vector.load %arg4[%c0_6, %c0_7] : memref<18x128xf32, #tpu.memory_space<vmem>>, vector<18x128xf32>
    tpu.vector_store %arg4[%c0_6, %c0_7], %7 {strides = array<i32>} : memref<18x128xf32, #tpu.memory_space<vmem>>, vector<18x128xf32>,
    return
  }
  func.func @transform_0(%arg0: i32) -> (i32, i32) {
    %c0_i32 = arith.constant 0 : i32
    %c0_i32_0 = arith.constant 0 : i32
    %c0_i32_1 = arith.constant 0 : i32
    return %c0_i32, %c0_i32_0 : i32, i32
  }
  func.func @transform_1(%arg0: i32) -> (i32, i32) {
    %c0_i32 = arith.constant 0 : i32
    %c0_i32_0 = arith.constant 0 : i32
    %c0_i32_1 = arith.constant 0 : i32
    return %c0_i32, %c0_i32_0 : i32, i32
  }
  func.func @transform_2(%arg0: i32) -> (i32, i32) {
    %c0_i32 = arith.constant 0 : i32
    %c0_i32_0 = arith.constant 0 : i32
    return %c0_i32, %arg0 : i32, i32
  }
  func.func @transform_3(%arg0: i32) -> (i32, i32) {
    %c0_i32 = arith.constant 0 : i32
    %c0_i32_0 = arith.constant 0 : i32
    return %c0_i32, %arg0 : i32, i32
  }
}

module attributes {stable_mosaic.version = 11 : i64} {
  func.func @_gemm_bias_relu_kernel(%arg0: i32, %arg1: memref<18x162xf32, #tpu.memory_space<vmem>>, %arg2: memref<18x1xf32, #tpu.memory_space<vmem>>, %arg3: memref<162x128xf32, #tpu.memory_space<vmem>>, %arg4: memref<18x128xf32, #tpu.memory_space<vmem>>) attributes {dimension_semantics = [#tpu.dimension_semantics<parallel>], iteration_bounds = array<i64: 1>, scalar_prefetch = 0 : i64, scratch_operands = 0 : i64, tpu.core_type = #tpu.core_type<tc>, window_params = [{pipeline_mode = #tpu.pipeline_mode<synchronous>, transform_indices = @transform_0, window_bounds = array<i64: 18, 162>}, {pipeline_mode = #tpu.pipeline_mode<synchronous>, transform_indices = @transform_1, window_bounds = array<i64: 18, 1>}, {transform_indices = @transform_2, window_bounds = array<i64: 162, 128>}, {transform_indices = @transform_3, window_bounds = array<i64: 18, 128>}]} {
    %c0 = arith.constant 0 : index
    %c0_0 = arith.constant 0 : index
    %0 = vector.load %arg1[%c0, %c0_0] : memref<18x162xf32, #tpu.memory_space<vmem>>, vector<18x162xf32>
    %c0_1 = arith.constant 0 : index
    %c0_2 = arith.constant 0 : index
    %1 = vector.load %arg3[%c0_1, %c0_2] : memref<162x128xf32, #tpu.memory_space<vmem>>, vector<162x128xf32>
    %cst = arith.constant dense<0.000000e+00> : vector<18x128xf32>
    %2 = tpu.matmul %0, %1, %cst {dimension_numbers = #tpu.dot_dimension_numbers<[1], [0], [0], [1], [0, 0, 1, 1], [], []>} : vector<18x162xf32>, vector<162x128xf32>, vector<18x128xf32> -> vector<18x128xf32>
    %c0_3 = arith.constant 0 : index
    %c0_4 = arith.constant 0 : index
    %3 = vector.load %arg2[%c0_3, %c0_4] : memref<18x1xf32, #tpu.memory_space<vmem>>, vector<18x1xf32>
    %4 = vector.broadcast %3 : vector<18x1xf32> to vector<18x128xf32>
    %5 = arith.addf %2, %4 : vector<18x128xf32>
    %cst_5 = arith.constant 0.000000e+00 : f32
    %6 = vector.broadcast %cst_5 : f32 to vector<18x128xf32>
    %7 = arith.maximumf %5, %6 : vector<18x128xf32>
    %c0_6 = arith.constant 0 : index
    %c0_7 = arith.constant 0 : index
    %8 = vector.load %arg4[%c0_6, %c0_7] : memref<18x128xf32, #tpu.memory_space<vmem>>, vector<18x128xf32>
    tpu.vector_store %arg4[%c0_6, %c0_7], %7 {strides = array<i32>} : memref<18x128xf32, #tpu.memory_space<vmem>>, vector<18x128xf32>,
    return
  }
  func.func @transform_0(%arg0: i32) -> (i32, i32) {
    %c0_i32 = arith.constant 0 : i32
    %c0_i32_0 = arith.constant 0 : i32
    %c0_i32_1 = arith.constant 0 : i32
    return %c0_i32, %c0_i32_0 : i32, i32
  }
  func.func @transform_1(%arg0: i32) -> (i32, i32) {
    %c0_i32 = arith.constant 0 : i32
    %c0_i32_0 = arith.constant 0 : i32
    %c0_i32_1 = arith.constant 0 : i32
    return %c0_i32, %c0_i32_0 : i32, i32
  }
  func.func @transform_2(%arg0: i32) -> (i32, i32) {
    %c0_i32 = arith.constant 0 : i32
    %c0_i32_0 = arith.constant 0 : i32
    return %c0_i32, %arg0 : i32, i32
  }
  func.func @transform_3(%arg0: i32) -> (i32, i32) {
    %c0_i32 = arith.constant 0 : i32
    %c0_i32_0 = arith.constant 0 : i32
    return %c0_i32, %arg0 : i32, i32
  }
}

module attributes {stable_mosaic.version = 11 : i64} {
  func.func @_gemm_bias_relu_kernel(%arg0: i32, %arg1: memref<20x162xf32, #tpu.memory_space<vmem>>, %arg2: memref<20x1xf32, #tpu.memory_space<vmem>>, %arg3: memref<162x32xf32, #tpu.memory_space<vmem>>, %arg4: memref<20x32xf32, #tpu.memory_space<vmem>>) attributes {dimension_semantics = [#tpu.dimension_semantics<parallel>], iteration_bounds = array<i64: 1>, scalar_prefetch = 0 : i64, scratch_operands = 0 : i64, tpu.core_type = #tpu.core_type<tc>, window_params = [{pipeline_mode = #tpu.pipeline_mode<synchronous>, transform_indices = @transform_0, window_bounds = array<i64: 20, 162>}, {pipeline_mode = #tpu.pipeline_mode<synchronous>, transform_indices = @transform_1, window_bounds = array<i64: 20, 1>}, {transform_indices = @transform_2, window_bounds = array<i64: 162, 32>}, {transform_indices = @transform_3, window_bounds = array<i64: 20, 32>}]} {
    %c0 = arith.constant 0 : index
    %c0_0 = arith.constant 0 : index
    %0 = vector.load %arg1[%c0, %c0_0] : memref<20x162xf32, #tpu.memory_space<vmem>>, vector<20x162xf32>
    %c0_1 = arith.constant 0 : index
    %c0_2 = arith.constant 0 : index
    %1 = vector.load %arg3[%c0_1, %c0_2] : memref<162x32xf32, #tpu.memory_space<vmem>>, vector<162x32xf32>
    %cst = arith.constant dense<0.000000e+00> : vector<20x32xf32>
    %2 = tpu.matmul %0, %1, %cst {dimension_numbers = #tpu.dot_dimension_numbers<[1], [0], [0], [1], [0, 0, 1, 1], [], []>} : vector<20x162xf32>, vector<162x32xf32>, vector<20x32xf32> -> vector<20x32xf32>
    %c0_3 = arith.constant 0 : index
    %c0_4 = arith.constant 0 : index
    %3 = vector.load %arg2[%c0_3, %c0_4] : memref<20x1xf32, #tpu.memory_space<vmem>>, vector<20x1xf32>
    %4 = vector.broadcast %3 : vector<20x1xf32> to vector<20x32xf32>
    %5 = arith.addf %2, %4 : vector<20x32xf32>
    %cst_5 = arith.constant 0.000000e+00 : f32
    %6 = vector.broadcast %cst_5 : f32 to vector<20x32xf32>
    %7 = arith.maximumf %5, %6 : vector<20x32xf32>
    %c0_6 = arith.constant 0 : index
    %c0_7 = arith.constant 0 : index
    %8 = vector.load %arg4[%c0_6, %c0_7] : memref<20x32xf32, #tpu.memory_space<vmem>>, vector<20x32xf32>
    tpu.vector_store %arg4[%c0_6, %c0_7], %7 {strides = array<i32>} : memref<20x32xf32, #tpu.memory_space<vmem>>, vector<20x32xf32>,
    return
  }
  func.func @transform_0(%arg0: i32) -> (i32, i32) {
    %c0_i32 = arith.constant 0 : i32
    %c0_i32_0 = arith.constant 0 : i32
    %c0_i32_1 = arith.constant 0 : i32
    return %c0_i32, %c0_i32_0 : i32, i32
  }
  func.func @transform_1(%arg0: i32) -> (i32, i32) {
    %c0_i32 = arith.constant 0 : i32
    %c0_i32_0 = arith.constant 0 : i32
    %c0_i32_1 = arith.constant 0 : i32
    return %c0_i32, %c0_i32_0 : i32, i32
  }
  func.func @transform_2(%arg0: i32) -> (i32, i32) {
    %c0_i32 = arith.constant 0 : i32
    %c0_i32_0 = arith.constant 0 : i32
    return %c0_i32, %arg0 : i32, i32
  }
  func.func @transform_3(%arg0: i32) -> (i32, i32) {
    %c0_i32 = arith.constant 0 : i32
    %c0_i32_0 = arith.constant 0 : i32
    return %c0_i32, %arg0 : i32, i32
  }
}

module attributes {stable_mosaic.version = 11 : i64} {
  func.func @_gemm_bias_relu_kernel(%arg0: i32, %arg1: memref<20x180xf32, #tpu.memory_space<vmem>>, %arg2: memref<20x1xf32, #tpu.memory_space<vmem>>, %arg3: memref<180x32xf32, #tpu.memory_space<vmem>>, %arg4: memref<20x32xf32, #tpu.memory_space<vmem>>) attributes {dimension_semantics = [#tpu.dimension_semantics<parallel>], iteration_bounds = array<i64: 1>, scalar_prefetch = 0 : i64, scratch_operands = 0 : i64, tpu.core_type = #tpu.core_type<tc>, window_params = [{pipeline_mode = #tpu.pipeline_mode<synchronous>, transform_indices = @transform_0, window_bounds = array<i64: 20, 180>}, {pipeline_mode = #tpu.pipeline_mode<synchronous>, transform_indices = @transform_1, window_bounds = array<i64: 20, 1>}, {transform_indices = @transform_2, window_bounds = array<i64: 180, 32>}, {transform_indices = @transform_3, window_bounds = array<i64: 20, 32>}]} {
    %c0 = arith.constant 0 : index
    %c0_0 = arith.constant 0 : index
    %0 = vector.load %arg1[%c0, %c0_0] : memref<20x180xf32, #tpu.memory_space<vmem>>, vector<20x180xf32>
    %c0_1 = arith.constant 0 : index
    %c0_2 = arith.constant 0 : index
    %1 = vector.load %arg3[%c0_1, %c0_2] : memref<180x32xf32, #tpu.memory_space<vmem>>, vector<180x32xf32>
    %cst = arith.constant dense<0.000000e+00> : vector<20x32xf32>
    %2 = tpu.matmul %0, %1, %cst {dimension_numbers = #tpu.dot_dimension_numbers<[1], [0], [0], [1], [0, 0, 1, 1], [], []>} : vector<20x180xf32>, vector<180x32xf32>, vector<20x32xf32> -> vector<20x32xf32>
    %c0_3 = arith.constant 0 : index
    %c0_4 = arith.constant 0 : index
    %3 = vector.load %arg2[%c0_3, %c0_4] : memref<20x1xf32, #tpu.memory_space<vmem>>, vector<20x1xf32>
    %4 = vector.broadcast %3 : vector<20x1xf32> to vector<20x32xf32>
    %5 = arith.addf %2, %4 : vector<20x32xf32>
    %cst_5 = arith.constant 0.000000e+00 : f32
    %6 = vector.broadcast %cst_5 : f32 to vector<20x32xf32>
    %7 = arith.maximumf %5, %6 : vector<20x32xf32>
    %c0_6 = arith.constant 0 : index
    %c0_7 = arith.constant 0 : index
    %8 = vector.load %arg4[%c0_6, %c0_7] : memref<20x32xf32, #tpu.memory_space<vmem>>, vector<20x32xf32>
    tpu.vector_store %arg4[%c0_6, %c0_7], %7 {strides = array<i32>} : memref<20x32xf32, #tpu.memory_space<vmem>>, vector<20x32xf32>,
    return
  }
  func.func @transform_0(%arg0: i32) -> (i32, i32) {
    %c0_i32 = arith.constant 0 : i32
    %c0_i32_0 = arith.constant 0 : i32
    %c0_i32_1 = arith.constant 0 : i32
    return %c0_i32, %c0_i32_0 : i32, i32
  }
  func.func @transform_1(%arg0: i32) -> (i32, i32) {
    %c0_i32 = arith.constant 0 : i32
    %c0_i32_0 = arith.constant 0 : i32
    %c0_i32_1 = arith.constant 0 : i32
    return %c0_i32, %c0_i32_0 : i32, i32
  }
  func.func @transform_2(%arg0: i32) -> (i32, i32) {
    %c0_i32 = arith.constant 0 : i32
    %c0_i32_0 = arith.constant 0 : i32
    return %c0_i32, %arg0 : i32, i32
  }
  func.func @transform_3(%arg0: i32) -> (i32, i32) {
    %c0_i32 = arith.constant 0 : i32
    %c0_i32_0 = arith.constant 0 : i32
    return %c0_i32, %arg0 : i32, i32
  }
}

</mosaic_0001>

<llo_original>
// kernel: context_extractor_forward.7
$region0: #{context_extractor_forward.7}
  #allocation0 [shape = 'u32[]', space=smem, size = 0x4, offset = 0x4, fixed_abs, tag = 'smem constant byte address 0x4 - core index']
  #allocation1 [shape = 'u32[144,128]{1,0:T(1,128)}', space=vmem, size = 0x12000, scoped, tag = 'internal scratch']
  %s0 = inlined_call_operand.vmem [shape: f32[16,147], index: 0, kind: input, shape index: {}]
  %s1 = inlined_call_operand.vmem [shape: f32[16,1], index: 1, kind: input, shape index: {}]
  %s2 = inlined_call_operand.vmem [shape: f32[147,512], index: 2, kind: input, shape index: {}]
  %s3 = inlined_call_operand.vmem [shape: f32[16,512], index: 3, kind: output, shape index: {}]
  %s4 = sld [smem:[#allocation0]]
  $region22: #{context_extractor_forward.7} parent=0
    _
  %s6 = ssub.s32 1, %s4
  %s7 = scalar_select 0, %s6, %s4
  // Predicated region
  $region2: #{context_extractor_forward.7} parent=0 // pred_check
    _
  $region3: #{context_extractor_forward.7} parent=0 // pred_check_branch
    %9 = sbr.rel (0) target = $region5
  $region4: #{context_extractor_forward.7} parent=0 // pred_region
    _
  $region5: #{context_extractor_forward.7} parent=0 // pred_fallthru
    _
  // Predicated region
  $region6: #{context_extractor_forward.7} parent=0 // pred_check
    _
  $region7: #{context_extractor_forward.7} parent=0 // pred_check_branch
    %11 = sbr.rel (0) target = $region9
  $region8: #{context_extractor_forward.7} parent=0 // pred_region
    _
  $region9: #{context_extractor_forward.7} parent=0 // pred_fallthru
    _
  // Predicated region
  $region10: #{context_extractor_forward.7} parent=0 // pred_check
    _
  $region11: #{context_extractor_forward.7} parent=0 // pred_check_branch
    %13 = sbr.rel (0) target = $region13
  $region12: #{context_extractor_forward.7} parent=0 // pred_region
    _
  $region13: #{context_extractor_forward.7} parent=0 // pred_fallthru
    _
  %v14 = vld [vmem:[%s0] sm:$0xff]
  %v15 = vld [vmem:[%s0 + $0x8] sm:$0xff]
  %v16 = vld [vmem:[%s0 + $0x10] sm:$0xff]
  %v17 = vld [vmem:[%s0 + $0x18] sm:$0xff]
  %v18 = vld [vmem:[%s2] sm:$0xff]
  %v19 = vld [vmem:[%s2 + $0x8] sm:$0xff]
  %v20 = vld [vmem:[%s2 + $0x10] sm:$0xff]
  %v21 = vld [vmem:[%s2 + $0x18] sm:$0xff]
  %v22 = vld [vmem:[%s2 + $0x20] sm:$0xff]
  %v23 = vld [vmem:[%s2 + $0x28] sm:$0xff]
  %v24 = vld [vmem:[%s2 + $0x30] sm:$0xff]
  %v25 = vld [vmem:[%s2 + $0x38] sm:$0xff]
  %v26 = vld [vmem:[%s2 + $0x40] sm:$0xff]
  %v27 = vld [vmem:[%s2 + $0x48] sm:$0xff]
  %v28 = vld [vmem:[%s2 + $0x50] sm:$0xff]
  %v29 = vld [vmem:[%s2 + $0x58] sm:$0xff]
  %v30 = vld [vmem:[%s2 + $0x60] sm:$0xff]
  %v31 = vld [vmem:[%s2 + $0x68] sm:$0xff]
  %v32 = vld [vmem:[%s2 + $0x70] sm:$0xff]
  %v33 = vld [vmem:[%s2 + $0x78] sm:$0xff]
  %v34 = vld [vmem:[%s2 + $0x80] sm:$0xff]
  %v35 = vld [vmem:[%s2 + $0x88] sm:$0xff]
  %v36 = vld [vmem:[%s2 + $0x90] sm:$0xff]
  %v37 = vld [vmem:[%s2 + $0x98] sm:$0xff]
  %v38 = vld [vmem:[%s2 + $0xa0] sm:$0xff]
  %v39 = vld [vmem:[%s2 + $0xa8] sm:$0xff]
  %v40 = vld [vmem:[%s2 + $0xb0] sm:$0xff]
  %v41 = vld [vmem:[%s2 + $0xb8] sm:$0xff]
  %v42 = vld [vmem:[%s2 + $0xc0] sm:$0xff]
  %v43 = vld [vmem:[%s2 + $0xc8] sm:$0xff]
  %v44 = vld [vmem:[%s2 + $0xd0] sm:$0xff]
  %v45 = vld [vmem:[%s2 + $0xd8] sm:$0xff]
  %v46 = vld [vmem:[%s2 + $0xe0] sm:$0xff]
  %v47 = vld [vmem:[%s2 + $0xe8] sm:$0xff]
  %v48 = vld [vmem:[%s2 + $0xf0] sm:$0xff]
  %v49 = vld [vmem:[%s2 + $0xf8] sm:$0xff]
  %v50 = vld [vmem:[%s2 + $0x100] sm:$0xff]
  %v51 = vld [vmem:[%s2 + $0x108] sm:$0xff]
  %v52 = vld [vmem:[%s2 + $0x110] sm:$0xff]
  %v53 = vld [vmem:[%s2 + $0x118] sm:$0xff]
  %v54 = vld [vmem:[%s2 + $0x120] sm:$0xff]
  %v55 = vld [vmem:[%s2 + $0x128] sm:$0xff]
  %v56 = vld [vmem:[%s2 + $0x130] sm:$0xff]
  %v57 = vld [vmem:[%s2 + $0x138] sm:$0xff]
  %v58 = vld [vmem:[%s2 + $0x140] sm:$0xff]
  %v59 = vld [vmem:[%s2 + $0x148] sm:$0xff]
  %v60 = vld [vmem:[%s2 + $0x150] sm:$0xff]
  %v61 = vld [vmem:[%s2 + $0x158] sm:$0xff]
  %v62 = vld [vmem:[%s2 + $0x160] sm:$0xff]
  %v63 = vld [vmem:[%s2 + $0x168] sm:$0xff]
  %v64 = vld [vmem:[%s2 + $0x170] sm:$0xff]
  %v65 = vld [vmem:[%s2 + $0x178] sm:$0xff]
  %v66 = vld [vmem:[%s2 + $0x180] sm:$0xff]
  %v67 = vld [vmem:[%s2 + $0x188] sm:$0xff]
  %v68 = vld [vmem:[%s2 + $0x190] sm:$0xff]
  %v69 = vld [vmem:[%s2 + $0x198] sm:$0xff]
  %v70 = vld [vmem:[%s2 + $0x1a0] sm:$0xff]
  %v71 = vld [vmem:[%s2 + $0x1a8] sm:$0xff]
  %v72 = vld [vmem:[%s2 + $0x1b0] sm:$0xff]
  %v73 = vld [vmem:[%s2 + $0x1b8] sm:$0xff]
  %v74 = vld [vmem:[%s2 + $0x1c0] sm:$0xff]
  %v75 = vld [vmem:[%s2 + $0x1c8] sm:$0xff]
  %v76 = vld [vmem:[%s2 + $0x1d0] sm:$0xff]
  %v77 = vld [vmem:[%s2 + $0x1d8] sm:$0xff]
  %v78 = vld [vmem:[%s2 + $0x1e0] sm:$0xff]
  %v79 = vld [vmem:[%s2 + $0x1e8] sm:$0xff]
  %v80 = vld [vmem:[%s2 + $0x1f0] sm:$0xff]
  %v81 = vld [vmem:[%s2 + $0x1f8] sm:$0xff]
  %v82 = vld [vmem:[%s2 + $0x200] sm:$0xff]
  %v83 = vld [vmem:[%s2 + $0x208] sm:$0xff]
  %v84 = vld [vmem:[%s2 + $0x210] sm:$0xff]
  %v85 = vld [vmem:[%s2 + $0x218] sm:$0xff]
  %v86 = vld [vmem:[%s2 + $0x220] sm:$0xff]
  %v87 = vld [vmem:[%s2 + $0x228] sm:$0xff]
  %v88 = vld [vmem:[%s2 + $0x230] sm:$0xff]
  %v89 = vld [vmem:[%s2 + $0x238] sm:$0xff]
  %v90 = vld [vmem:[%s2 + $0x240] sm:$0x7]
  %v91 = vld [vmem:[%s2 + $0x248] sm:$0x7]
  %v92 = vld [vmem:[%s2 + $0x250] sm:$0x7]
  %v93 = vld [vmem:[%s2 + $0x258] sm:$0x7]
  %v94 = vld [vmem:[%s1] sm:$0xff]
  %v95 = vld [vmem:[%s1 + $0x8] sm:$0xff]
  %97 = vset.pattern.permute.xlu0 0
  %98 = vperm.xlu0 %97, %v94
  %v99 = vpop.permute.xlu0 %98
  %102 = vset.pattern.permute.xlu0 0
  %103 = vperm.xlu0 %102, %v95
  %v104 = vpop.permute.xlu0 %103
  %vm106 = vcmask 154624
  %v108 = vsel %vm106, %v15, 0
  %v111 = vsel %vm106, %v17, 0
  %vm113 = vcmask 1042432
  %v115 = vsel %vm113, %v90, 0
  %v118 = vsel %vm113, %v91, 0
  %v121 = vsel %vm113, %v92, 0
  %v124 = vsel %vm113, %v93, 0
  %126 = vmatprep.subr.mxu0 %v19
  %127 = vmatpush1.msra.mxu0 %v18
  %128 = vmatprep.subr.mxu0 %v23
  %129 = vmatpush1.msra.mxu0 %v22
  %130 = vmatprep.subr.mxu0 %v27
  %131 = vmatpush1.msra.mxu0 %v26
  %132 = vmatprep.subr.mxu0 %v31
  %133 = vmatpush1.msra.mxu0 %v30
  %134 = vmatprep.subr.mxu0 %v35
  %135 = vmatpush1.msra.mxu0 %v34
  %136 = vmatprep.subr.mxu0 %v39
  %137 = vmatpush1.msra.mxu0 %v38
  %138 = vmatprep.subr.mxu0 %v43
  %139 = vmatpush1.msra.mxu0 %v42
  %140 = vmatprep.subr.mxu0 %v47
  %141 = vmatpush1.msra.mxu0 %v46
  %142 = vmatprep.subr.mxu0 %v51
  %143 = vmatpush1.msra.mxu0 %v50
  %144 = vmatprep.subr.mxu0 %v55
  %145 = vmatpush1.msra.mxu0 %v54
  %146 = vmatprep.subr.mxu0 %v59
  %147 = vmatpush1.msra.mxu0 %v58
  %148 = vmatprep.subr.mxu0 %v63
  %149 = vmatpush1.msra.mxu0 %v62
  %150 = vmatprep.subr.mxu0 %v67
  %151 = vmatpush1.msra.mxu0 %v66
  %152 = vmatprep.subr.mxu0 %v71
  %153 = vmatpush1.msra.mxu0 %v70
  %154 = vmatprep.subr.mxu0 %v75
  %155 = vmatpush1.msra.mxu0 %v74
  %156 = vmatprep.subr.mxu0 %v79
  %157 = vmatpush1.msra.mxu0 %v78
  %158 = vmatprep.subr.mxu0 %v83
  %159 = vmatpush1.msra.mxu0 %v82
  %160 = vmatprep.subr.mxu0 %v87
  %161 = vmatpush1.msra.mxu0 %v86
  %162 = vmatprep.subr.mxu0 %v118
  %163 = vmatpush1.msra.mxu0 %v115
  %164 = vmatprep.subr.mxu0 0.0
  %165 = vmatpush1.msra.mxu0 0.0
  %166 = vmatprep.subr.mxu0 0.0
  %167 = vmatpush1.msra.mxu0 0.0
  %168 = vmatprep.subr.mxu0 0.0
  %169 = vmatpush1.msra.mxu0 0.0
  %170 = vmatprep.subr.mxu0 0.0
  %171 = vmatpush1.msra.mxu0 0.0
  %172 = vmatprep.subr.mxu0 0.0
  %173 = vmatpush1.msra.mxu0 0.0
  %174 = vmatprep.subr.mxu0 0.0
  %175 = vmatpush1.msra.mxu0 0.0
  %176 = vmatprep.subr.mxu0 0.0
  %177 = vmatpush1.msra.mxu0 0.0
  %178 = vmatprep.subr.mxu0 0.0
  %179 = vmatpush1.msra.mxu0 0.0
  %180 = vmatprep.subr.mxu0 0.0
  %181 = vmatpush1.msra.mxu0 0.0
  %182 = vmatprep.subr.mxu0 0.0
  %183 = vmatpush1.msra.mxu0 0.0
  %184 = vmatprep.subr.mxu0 0.0
  %185 = vmatpush1.msra.mxu0 0.0
  %186 = vmatprep.subr.mxu0 0.0
  %187 = vmatpush1.msra.mxu0 0.0
  %188 = vmatprep.subr.mxu0 0.0
  %189 = vmatpush1.msra.mxu0 0.0
  %190 = vmatprep.mubr.f32.mxu0 %v108
  %191 = vmatmul.mubr.f32.gmra.mrb[0].mxu0 %v14
  %v192 = vpop.f32.mrb[0].mxu0
  %v193 = vadd.f32 %v99, %v192
  %v194 = vpop.f32.mrb[0].mxu0
  %v195 = vadd.f32 %v99, %v194
  %196 = vmatprep.mubr.f32.mxu0 %v111
  %197 = vmatmul.mubr.f32.gmra.mrb[0].mxu0 %v16
  %v198 = vpop.f32.mrb[0].mxu0
  %v199 = vadd.f32 %v104, %v198
  %v200 = vpop.f32.mrb[0].mxu0
  %v201 = vadd.f32 %v104, %v200
  %202 = vdwg.mxu0
  %203 = vmatprep.subr.mxu0 %v21
  %204 = vmatpush1.msra.mxu0 %v20
  %205 = vmatprep.subr.mxu0 %v25
  %206 = vmatpush1.msra.mxu0 %v24
  %207 = vmatprep.subr.mxu0 %v29
  %208 = vmatpush1.msra.mxu0 %v28
  %209 = vmatprep.subr.mxu0 %v33
  %210 = vmatpush1.msra.mxu0 %v32
  %211 = vmatprep.subr.mxu0 %v37
  %212 = vmatpush1.msra.mxu0 %v36
  %213 = vmatprep.subr.mxu0 %v41
  %214 = vmatpush1.msra.mxu0 %v40
  %215 = vmatprep.subr.mxu0 %v45
  %216 = vmatpush1.msra.mxu0 %v44
  %217 = vmatprep.subr.mxu0 %v49
  %218 = vmatpush1.msra.mxu0 %v48
  %219 = vmatprep.subr.mxu0 %v53
  %220 = vmatpush1.msra.mxu0 %v52
  %221 = vmatprep.subr.mxu0 %v57
  %222 = vmatpush1.msra.mxu0 %v56
  %223 = vmatprep.subr.mxu0 %v61
  %224 = vmatpush1.msra.mxu0 %v60
  %225 = vmatprep.subr.mxu0 %v65
  %226 = vmatpush1.msra.mxu0 %v64
  %227 = vmatprep.subr.mxu0 %v69
  %228 = vmatpush1.msra.mxu0 %v68
  %229 = vmatprep.subr.mxu0 %v73
  %230 = vmatpush1.msra.mxu0 %v72
  %231 = vmatprep.subr.mxu0 %v77
  %232 = vmatpush1.msra.mxu0 %v76
  %233 = vmatprep.subr.mxu0 %v81
  %234 = vmatpush1.msra.mxu0 %v80
  %235 = vmatprep.subr.mxu0 %v85
  %236 = vmatpush1.msra.mxu0 %v84
  %237 = vmatprep.subr.mxu0 %v89
  %238 = vmatpush1.msra.mxu0 %v88
  %239 = vmatprep.subr.mxu0 %v124
  %240 = vmatpush1.msra.mxu0 %v121
  %241 = vmatprep.subr.mxu0 0.0
  %242 = vmatpush1.msra.mxu0 0.0
  %243 = vmatprep.subr.mxu0 0.0
  %244 = vmatpush1.msra.mxu0 0.0
  %245 = vmatprep.subr.mxu0 0.0
  %246 = vmatpush1.msra.mxu0 0.0
  %247 = vmatprep.subr.mxu0 0.0
  %248 = vmatpush1.msra.mxu0 0.0
  %249 = vmatprep.subr.mxu0 0.0
  %250 = vmatpush1.msra.mxu0 0.0
  %251 = vmatprep.subr.mxu0 0.0
  %252 = vmatpush1.msra.mxu0 0.0
  %253 = vmatprep.subr.mxu0 0.0
  %254 = vmatpush1.msra.mxu0 0.0
  %255 = vmatprep.subr.mxu0 0.0
  %256 = vmatpush1.msra.mxu0 0.0
  %257 = vmatprep.subr.mxu0 0.0
  %258 = vmatpush1.msra.mxu0 0.0
  %259 = vmatprep.subr.mxu0 0.0
  %260 = vmatpush1.msra.mxu0 0.0
  %261 = vmatprep.subr.mxu0 0.0
  %262 = vmatpush1.msra.mxu0 0.0
  %263 = vmatprep.subr.mxu0 0.0
  %264 = vmatpush1.msra.mxu0 0.0
  %265 = vmatprep.subr.mxu0 0.0
  %266 = vmatpush1.msra.mxu0 0.0
  %267 = vmatprep.mubr.f32.mxu0 %v108
  %268 = vmatmul.mubr.f32.gmra.mrb[0].mxu0 %v14
  %v269 = vpop.f32.mrb[0].mxu0
  %v270 = vadd.f32 %v99, %v269
  %v271 = vpop.f32.mrb[0].mxu0
  %v272 = vadd.f32 %v99, %v271
  %273 = vmatprep.mubr.f32.mxu0 %v111
  %274 = vmatmul.mubr.f32.gmra.mrb[0].mxu0 %v16
  %v275 = vpop.f32.mrb[0].mxu0
  %v276 = vadd.f32 %v104, %v275
  %v277 = vpop.f32.mrb[0].mxu0
  %v278 = vadd.f32 %v104, %v277
  %279 = vdwg.mxu0
  %v280 = vmax.f32 %v193, 0.0
  %v281 = vmax.f32 %v195, 0.0
  %v282 = vmax.f32 %v270, 0.0
  %v283 = vmax.f32 %v272, 0.0
  %v284 = vmax.f32 %v199, 0.0
  %v285 = vmax.f32 %v201, 0.0
  %v286 = vmax.f32 %v276, 0.0
  %v287 = vmax.f32 %v278, 0.0
  %288 = vst [vmem:[%s3] sm:$0xff] %v280
  %289 = vst [vmem:[%s3 + $0x8] sm:$0xff] %v281
  %290 = vst [vmem:[%s3 + $0x10] sm:$0xff] %v282
  %291 = vst [vmem:[%s3 + $0x18] sm:$0xff] %v283
  %292 = vst [vmem:[%s3 + $0x20] sm:$0xff] %v284
  %293 = vst [vmem:[%s3 + $0x28] sm:$0xff] %v285
  %294 = vst [vmem:[%s3 + $0x30] sm:$0xff] %v286
  %295 = vst [vmem:[%s3 + $0x38] sm:$0xff] %v287
  // Predicated region
  $region14: #{context_extractor_forward.7} parent=0 // pred_check
    _
  $region15: #{context_extractor_forward.7} parent=0 // pred_check_branch
    %297 = sbr.rel (0) target = $region17
  $region16: #{context_extractor_forward.7} parent=0 // pred_region
    _
  $region17: #{context_extractor_forward.7} parent=0 // pred_fallthru
    _
  // Predicated region
  $region18: #{context_extractor_forward.7} parent=0 // pred_check
    _
  $region19: #{context_extractor_forward.7} parent=0 // pred_check_branch
    %299 = sbr.rel (0) target = $region21
  $region20: #{context_extractor_forward.7} parent=0 // pred_region
    _
  $region21: #{context_extractor_forward.7} parent=0 // pred_fallthru
    _

// kernel: context_extractor_forward.8
$region0: #{context_extractor_forward.8}
  #allocation0 [shape = 'u32[]', space=smem, size = 0x4, offset = 0x4, fixed_abs, tag = 'smem constant byte address 0x4 - core index']
  #allocation1 [shape = 'u32[144,128]{1,0:T(1,128)}', space=vmem, size = 0x12000, scoped, tag = 'internal scratch']
  %s0 = inlined_call_operand.vmem [shape: f32[16,144], index: 0, kind: input, shape index: {}]
  %s1 = inlined_call_operand.vmem [shape: f32[16,1], index: 1, kind: input, shape index: {}]
  %s2 = inlined_call_operand.vmem [shape: f32[144,512], index: 2, kind: input, shape index: {}]
  %s3 = inlined_call_operand.vmem [shape: f32[16,512], index: 3, kind: output, shape index: {}]
  %s4 = sld [smem:[#allocation0]]
  $region22: #{context_extractor_forward.8} parent=0
    _
  %s6 = ssub.s32 1, %s4
  %s7 = scalar_select 0, %s6, %s4
  // Predicated region
  $region2: #{context_extractor_forward.8} parent=0 // pred_check
    _
  $region3: #{context_extractor_forward.8} parent=0 // pred_check_branch
    %9 = sbr.rel (0) target = $region5
  $region4: #{context_extractor_forward.8} parent=0 // pred_region
    _
  $region5: #{context_extractor_forward.8} parent=0 // pred_fallthru
    _
  // Predicated region
  $region6: #{context_extractor_forward.8} parent=0 // pred_check
    _
  $region7: #{context_extractor_forward.8} parent=0 // pred_check_branch
    %11 = sbr.rel (0) target = $region9
  $region8: #{context_extractor_forward.8} parent=0 // pred_region
    _
  $region9: #{context_extractor_forward.8} parent=0 // pred_fallthru
    _
  // Predicated region
  $region10: #{context_extractor_forward.8} parent=0 // pred_check
    _
  $region11: #{context_extractor_forward.8} parent=0 // pred_check_branch
    %13 = sbr.rel (0) target = $region13
  $region12: #{context_extractor_forward.8} parent=0 // pred_region
    _
  $region13: #{context_extractor_forward.8} parent=0 // pred_fallthru
    _
  %v14 = vld [vmem:[%s0] sm:$0xff]
  %v15 = vld [vmem:[%s0 + $0x8] sm:$0xff]
  %v16 = vld [vmem:[%s0 + $0x10] sm:$0xff]
  %v17 = vld [vmem:[%s0 + $0x18] sm:$0xff]
  %v18 = vld [vmem:[%s2] sm:$0xff]
  %v19 = vld [vmem:[%s2 + $0x8] sm:$0xff]
  %v20 = vld [vmem:[%s2 + $0x10] sm:$0xff]
  %v21 = vld [vmem:[%s2 + $0x18] sm:$0xff]
  %v22 = vld [vmem:[%s2 + $0x20] sm:$0xff]
  %v23 = vld [vmem:[%s2 + $0x28] sm:$0xff]
  %v24 = vld [vmem:[%s2 + $0x30] sm:$0xff]
  %v25 = vld [vmem:[%s2 + $0x38] sm:$0xff]
  %v26 = vld [vmem:[%s2 + $0x40] sm:$0xff]
  %v27 = vld [vmem:[%s2 + $0x48] sm:$0xff]
  %v28 = vld [vmem:[%s2 + $0x50] sm:$0xff]
  %v29 = vld [vmem:[%s2 + $0x58] sm:$0xff]
  %v30 = vld [vmem:[%s2 + $0x60] sm:$0xff]
  %v31 = vld [vmem:[%s2 + $0x68] sm:$0xff]
  %v32 = vld [vmem:[%s2 + $0x70] sm:$0xff]
  %v33 = vld [vmem:[%s2 + $0x78] sm:$0xff]
  %v34 = vld [vmem:[%s2 + $0x80] sm:$0xff]
  %v35 = vld [vmem:[%s2 + $0x88] sm:$0xff]
  %v36 = vld [vmem:[%s2 + $0x90] sm:$0xff]
  %v37 = vld [vmem:[%s2 + $0x98] sm:$0xff]
  %v38 = vld [vmem:[%s2 + $0xa0] sm:$0xff]
  %v39 = vld [vmem:[%s2 + $0xa8] sm:$0xff]
  %v40 = vld [vmem:[%s2 + $0xb0] sm:$0xff]
  %v41 = vld [vmem:[%s2 + $0xb8] sm:$0xff]
  %v42 = vld [vmem:[%s2 + $0xc0] sm:$0xff]
  %v43 = vld [vmem:[%s2 + $0xc8] sm:$0xff]
  %v44 = vld [vmem:[%s2 + $0xd0] sm:$0xff]
  %v45 = vld [vmem:[%s2 + $0xd8] sm:$0xff]
  %v46 = vld [vmem:[%s2 + $0xe0] sm:$0xff]
  %v47 = vld [vmem:[%s2 + $0xe8] sm:$0xff]
  %v48 = vld [vmem:[%s2 + $0xf0] sm:$0xff]
  %v49 = vld [vmem:[%s2 + $0xf8] sm:$0xff]
  %v50 = vld [vmem:[%s2 + $0x100] sm:$0xff]
  %v51 = vld [vmem:[%s2 + $0x108] sm:$0xff]
  %v52 = vld [vmem:[%s2 + $0x110] sm:$0xff]
  %v53 = vld [vmem:[%s2 + $0x118] sm:$0xff]
  %v54 = vld [vmem:[%s2 + $0x120] sm:$0xff]
  %v55 = vld [vmem:[%s2 + $0x128] sm:$0xff]
  %v56 = vld [vmem:[%s2 + $0x130] sm:$0xff]
  %v57 = vld [vmem:[%s2 + $0x138] sm:$0xff]
  %v58 = vld [vmem:[%s2 + $0x140] sm:$0xff]
  %v59 = vld [vmem:[%s2 + $0x148] sm:$0xff]
  %v60 = vld [vmem:[%s2 + $0x150] sm:$0xff]
  %v61 = vld [vmem:[%s2 + $0x158] sm:$0xff]
  %v62 = vld [vmem:[%s2 + $0x160] sm:$0xff]
  %v63 = vld [vmem:[%s2 + $0x168] sm:$0xff]
  %v64 = vld [vmem:[%s2 + $0x170] sm:$0xff]
  %v65 = vld [vmem:[%s2 + $0x178] sm:$0xff]
  %v66 = vld [vmem:[%s2 + $0x180] sm:$0xff]
  %v67 = vld [vmem:[%s2 + $0x188] sm:$0xff]
  %v68 = vld [vmem:[%s2 + $0x190] sm:$0xff]
  %v69 = vld [vmem:[%s2 + $0x198] sm:$0xff]
  %v70 = vld [vmem:[%s2 + $0x1a0] sm:$0xff]
  %v71 = vld [vmem:[%s2 + $0x1a8] sm:$0xff]
  %v72 = vld [vmem:[%s2 + $0x1b0] sm:$0xff]
  %v73 = vld [vmem:[%s2 + $0x1b8] sm:$0xff]
  %v74 = vld [vmem:[%s2 + $0x1c0] sm:$0xff]
  %v75 = vld [vmem:[%s2 + $0x1c8] sm:$0xff]
  %v76 = vld [vmem:[%s2 + $0x1d0] sm:$0xff]
  %v77 = vld [vmem:[%s2 + $0x1d8] sm:$0xff]
  %v78 = vld [vmem:[%s2 + $0x1e0] sm:$0xff]
  %v79 = vld [vmem:[%s2 + $0x1e8] sm:$0xff]
  %v80 = vld [vmem:[%s2 + $0x1f0] sm:$0xff]
  %v81 = vld [vmem:[%s2 + $0x1f8] sm:$0xff]
  %v82 = vld [vmem:[%s2 + $0x200] sm:$0xff]
  %v83 = vld [vmem:[%s2 + $0x208] sm:$0xff]
  %v84 = vld [vmem:[%s2 + $0x210] sm:$0xff]
  %v85 = vld [vmem:[%s2 + $0x218] sm:$0xff]
  %v86 = vld [vmem:[%s2 + $0x220] sm:$0xff]
  %v87 = vld [vmem:[%s2 + $0x228] sm:$0xff]
  %v88 = vld [vmem:[%s2 + $0x230] sm:$0xff]
  %v89 = vld [vmem:[%s2 + $0x238] sm:$0xff]
  %v90 = vld [vmem:[%s1] sm:$0xff]
  %v91 = vld [vmem:[%s1 + $0x8] sm:$0xff]
  %93 = vset.pattern.permute.xlu0 0
  %94 = vperm.xlu0 %93, %v90
  %v95 = vpop.permute.xlu0 %94
  %98 = vset.pattern.permute.xlu0 0
  %99 = vperm.xlu0 %98, %v91
  %v100 = vpop.permute.xlu0 %99
  %vm102 = vcmask 130048
  %v104 = vsel %vm102, %v15, 0
  %v107 = vsel %vm102, %v17, 0
  %109 = vmatprep.subr.mxu0 %v19
  %110 = vmatpush1.msra.mxu0 %v18
  %111 = vmatprep.subr.mxu0 %v23
  %112 = vmatpush1.msra.mxu0 %v22
  %113 = vmatprep.subr.mxu0 %v27
  %114 = vmatpush1.msra.mxu0 %v26
  %115 = vmatprep.subr.mxu0 %v31
  %116 = vmatpush1.msra.mxu0 %v30
  %117 = vmatprep.subr.mxu0 %v35
  %118 = vmatpush1.msra.mxu0 %v34
  %119 = vmatprep.subr.mxu0 %v39
  %120 = vmatpush1.msra.mxu0 %v38
  %121 = vmatprep.subr.mxu0 %v43
  %122 = vmatpush1.msra.mxu0 %v42
  %123 = vmatprep.subr.mxu0 %v47
  %124 = vmatpush1.msra.mxu0 %v46
  %125 = vmatprep.subr.mxu0 %v51
  %126 = vmatpush1.msra.mxu0 %v50
  %127 = vmatprep.subr.mxu0 %v55
  %128 = vmatpush1.msra.mxu0 %v54
  %129 = vmatprep.subr.mxu0 %v59
  %130 = vmatpush1.msra.mxu0 %v58
  %131 = vmatprep.subr.mxu0 %v63
  %132 = vmatpush1.msra.mxu0 %v62
  %133 = vmatprep.subr.mxu0 %v67
  %134 = vmatpush1.msra.mxu0 %v66
  %135 = vmatprep.subr.mxu0 %v71
  %136 = vmatpush1.msra.mxu0 %v70
  %137 = vmatprep.subr.mxu0 %v75
  %138 = vmatpush1.msra.mxu0 %v74
  %139 = vmatprep.subr.mxu0 %v79
  %140 = vmatpush1.msra.mxu0 %v78
  %141 = vmatprep.subr.mxu0 %v83
  %142 = vmatpush1.msra.mxu0 %v82
  %143 = vmatprep.subr.mxu0 %v87
  %144 = vmatpush1.msra.mxu0 %v86
  %145 = vmatprep.subr.mxu0 0.0
  %146 = vmatpush1.msra.mxu0 0.0
  %147 = vmatprep.subr.mxu0 0.0
  %148 = vmatpush1.msra.mxu0 0.0
  %149 = vmatprep.subr.mxu0 0.0
  %150 = vmatpush1.msra.mxu0 0.0
  %151 = vmatprep.subr.mxu0 0.0
  %152 = vmatpush1.msra.mxu0 0.0
  %153 = vmatprep.subr.mxu0 0.0
  %154 = vmatpush1.msra.mxu0 0.0
  %155 = vmatprep.subr.mxu0 0.0
  %156 = vmatpush1.msra.mxu0 0.0
  %157 = vmatprep.subr.mxu0 0.0
  %158 = vmatpush1.msra.mxu0 0.0
  %159 = vmatprep.subr.mxu0 0.0
  %160 = vmatpush1.msra.mxu0 0.0
  %161 = vmatprep.subr.mxu0 0.0
  %162 = vmatpush1.msra.mxu0 0.0
  %163 = vmatprep.subr.mxu0 0.0
  %164 = vmatpush1.msra.mxu0 0.0
  %165 = vmatprep.subr.mxu0 0.0
  %166 = vmatpush1.msra.mxu0 0.0
  %167 = vmatprep.subr.mxu0 0.0
  %168 = vmatpush1.msra.mxu0 0.0
  %169 = vmatprep.subr.mxu0 0.0
  %170 = vmatpush1.msra.mxu0 0.0
  %171 = vmatprep.subr.mxu0 0.0
  %172 = vmatpush1.msra.mxu0 0.0
  %173 = vmatprep.mubr.f32.mxu0 %v104
  %174 = vmatmul.mubr.f32.gmra.mrb[0].mxu0 %v14
  %v175 = vpop.f32.mrb[0].mxu0
  %v176 = vadd.f32 %v95, %v175
  %v177 = vpop.f32.mrb[0].mxu0
  %v178 = vadd.f32 %v95, %v177
  %179 = vmatprep.mubr.f32.mxu0 %v107
  %180 = vmatmul.mubr.f32.gmra.mrb[0].mxu0 %v16
  %v181 = vpop.f32.mrb[0].mxu0
  %v182 = vadd.f32 %v100, %v181
  %v183 = vpop.f32.mrb[0].mxu0
  %v184 = vadd.f32 %v100, %v183
  %185 = vdwg.mxu0
  %186 = vmatprep.subr.mxu0 %v21
  %187 = vmatpush1.msra.mxu0 %v20
  %188 = vmatprep.subr.mxu0 %v25
  %189 = vmatpush1.msra.mxu0 %v24
  %190 = vmatprep.subr.mxu0 %v29
  %191 = vmatpush1.msra.mxu0 %v28
  %192 = vmatprep.subr.mxu0 %v33
  %193 = vmatpush1.msra.mxu0 %v32
  %194 = vmatprep.subr.mxu0 %v37
  %195 = vmatpush1.msra.mxu0 %v36
  %196 = vmatprep.subr.mxu0 %v41
  %197 = vmatpush1.msra.mxu0 %v40
  %198 = vmatprep.subr.mxu0 %v45
  %199 = vmatpush1.msra.mxu0 %v44
  %200 = vmatprep.subr.mxu0 %v49
  %201 = vmatpush1.msra.mxu0 %v48
  %202 = vmatprep.subr.mxu0 %v53
  %203 = vmatpush1.msra.mxu0 %v52
  %204 = vmatprep.subr.mxu0 %v57
  %205 = vmatpush1.msra.mxu0 %v56
  %206 = vmatprep.subr.mxu0 %v61
  %207 = vmatpush1.msra.mxu0 %v60
  %208 = vmatprep.subr.mxu0 %v65
  %209 = vmatpush1.msra.mxu0 %v64
  %210 = vmatprep.subr.mxu0 %v69
  %211 = vmatpush1.msra.mxu0 %v68
  %212 = vmatprep.subr.mxu0 %v73
  %213 = vmatpush1.msra.mxu0 %v72
  %214 = vmatprep.subr.mxu0 %v77
  %215 = vmatpush1.msra.mxu0 %v76
  %216 = vmatprep.subr.mxu0 %v81
  %217 = vmatpush1.msra.mxu0 %v80
  %218 = vmatprep.subr.mxu0 %v85
  %219 = vmatpush1.msra.mxu0 %v84
  %220 = vmatprep.subr.mxu0 %v89
  %221 = vmatpush1.msra.mxu0 %v88
  %222 = vmatprep.subr.mxu0 0.0
  %223 = vmatpush1.msra.mxu0 0.0
  %224 = vmatprep.subr.mxu0 0.0
  %225 = vmatpush1.msra.mxu0 0.0
  %226 = vmatprep.subr.mxu0 0.0
  %227 = vmatpush1.msra.mxu0 0.0
  %228 = vmatprep.subr.mxu0 0.0
  %229 = vmatpush1.msra.mxu0 0.0
  %230 = vmatprep.subr.mxu0 0.0
  %231 = vmatpush1.msra.mxu0 0.0
  %232 = vmatprep.subr.mxu0 0.0
  %233 = vmatpush1.msra.mxu0 0.0
  %234 = vmatprep.subr.mxu0 0.0
  %235 = vmatpush1.msra.mxu0 0.0
  %236 = vmatprep.subr.mxu0 0.0
  %237 = vmatpush1.msra.mxu0 0.0
  %238 = vmatprep.subr.mxu0 0.0
  %239 = vmatpush1.msra.mxu0 0.0
  %240 = vmatprep.subr.mxu0 0.0
  %241 = vmatpush1.msra.mxu0 0.0
  %242 = vmatprep.subr.mxu0 0.0
  %243 = vmatpush1.msra.mxu0 0.0
  %244 = vmatprep.subr.mxu0 0.0
  %245 = vmatpush1.msra.mxu0 0.0
  %246 = vmatprep.subr.mxu0 0.0
  %247 = vmatpush1.msra.mxu0 0.0
  %248 = vmatprep.subr.mxu0 0.0
  %249 = vmatpush1.msra.mxu0 0.0
  %250 = vmatprep.mubr.f32.mxu0 %v104
  %251 = vmatmul.mubr.f32.gmra.mrb[0].mxu0 %v14
  %v252 = vpop.f32.mrb[0].mxu0
  %v253 = vadd.f32 %v95, %v252
  %v254 = vpop.f32.mrb[0].mxu0
  %v255 = vadd.f32 %v95, %v254
  %256 = vmatprep.mubr.f32.mxu0 %v107
  %257 = vmatmul.mubr.f32.gmra.mrb[0].mxu0 %v16
  %v258 = vpop.f32.mrb[0].mxu0
  %v259 = vadd.f32 %v100, %v258
  %v260 = vpop.f32.mrb[0].mxu0
  %v261 = vadd.f32 %v100, %v260
  %262 = vdwg.mxu0
  %v263 = vmax.f32 %v176, 0.0
  %v264 = vmax.f32 %v178, 0.0
  %v265 = vmax.f32 %v253, 0.0
  %v266 = vmax.f32 %v255, 0.0
  %v267 = vmax.f32 %v182, 0.0
  %v268 = vmax.f32 %v184, 0.0
  %v269 = vmax.f32 %v259, 0.0
  %v270 = vmax.f32 %v261, 0.0
  %271 = vst [vmem:[%s3] sm:$0xff] %v263
  %272 = vst [vmem:[%s3 + $0x8] sm:$0xff] %v264
  %273 = vst [vmem:[%s3 + $0x10] sm:$0xff] %v265
  %274 = vst [vmem:[%s3 + $0x18] sm:$0xff] %v266
  %275 = vst [vmem:[%s3 + $0x20] sm:$0xff] %v267
  %276 = vst [vmem:[%s3 + $0x28] sm:$0xff] %v268
  %277 = vst [vmem:[%s3 + $0x30] sm:$0xff] %v269
  %278 = vst [vmem:[%s3 + $0x38] sm:$0xff] %v270
  // Predicated region
  $region14: #{context_extractor_forward.8} parent=0 // pred_check
    _
  $region15: #{context_extractor_forward.8} parent=0 // pred_check_branch
    %280 = sbr.rel (0) target = $region17
  $region16: #{context_extractor_forward.8} parent=0 // pred_region
    _
  $region17: #{context_extractor_forward.8} parent=0 // pred_fallthru
    _
  // Predicated region
  $region18: #{context_extractor_forward.8} parent=0 // pred_check
    _
  $region19: #{context_extractor_forward.8} parent=0 // pred_check_branch
    %282 = sbr.rel (0) target = $region21
  $region20: #{context_extractor_forward.8} parent=0 // pred_region
    _
  $region21: #{context_extractor_forward.8} parent=0 // pred_fallthru
    _

// kernel: context_extractor_forward.10
$region0: #{context_extractor_forward.10}
  #allocation0 [shape = 'u32[]', space=smem, size = 0x4, offset = 0x4, fixed_abs, tag = 'smem constant byte address 0x4 - core index']
  #allocation1 [shape = 'u32[144,128]{1,0:T(1,128)}', space=vmem, size = 0x12000, scoped, tag = 'internal scratch']
  %s0 = inlined_call_operand.vmem [shape: f32[18,144], index: 0, kind: input, shape index: {}]
  %s1 = inlined_call_operand.vmem [shape: f32[18,1], index: 1, kind: input, shape index: {}]
  %s2 = inlined_call_operand.vmem [shape: f32[144,128], index: 2, kind: input, shape index: {}]
  %s3 = inlined_call_operand.vmem [shape: f32[18,128], index: 3, kind: output, shape index: {}]
  %s4 = sld [smem:[#allocation0]]
  $region22: #{context_extractor_forward.10} parent=0
    _
  %s6 = ssub.s32 1, %s4
  %s7 = scalar_select 0, %s6, %s4
  // Predicated region
  $region2: #{context_extractor_forward.10} parent=0 // pred_check
    _
  $region3: #{context_extractor_forward.10} parent=0 // pred_check_branch
    %9 = sbr.rel (0) target = $region5
  $region4: #{context_extractor_forward.10} parent=0 // pred_region
    _
  $region5: #{context_extractor_forward.10} parent=0 // pred_fallthru
    _
  // Predicated region
  $region6: #{context_extractor_forward.10} parent=0 // pred_check
    _
  $region7: #{context_extractor_forward.10} parent=0 // pred_check_branch
    %11 = sbr.rel (0) target = $region9
  $region8: #{context_extractor_forward.10} parent=0 // pred_region
    _
  $region9: #{context_extractor_forward.10} parent=0 // pred_fallthru
    _
  // Predicated region
  $region10: #{context_extractor_forward.10} parent=0 // pred_check
    _
  $region11: #{context_extractor_forward.10} parent=0 // pred_check_branch
    %13 = sbr.rel (0) target = $region13
  $region12: #{context_extractor_forward.10} parent=0 // pred_region
    _
  $region13: #{context_extractor_forward.10} parent=0 // pred_fallthru
    _
  %v14 = vld [vmem:[%s0] sm:$0xff]
  %v15 = vld [vmem:[%s0 + $0x8] sm:$0xff]
  %v16 = vld [vmem:[%s0 + $0x10] sm:$0xff]
  %v17 = vld [vmem:[%s0 + $0x18] sm:$0xff]
  %v18 = vld [vmem:[%s0 + $0x20] sm:$0x3]
  %v19 = vld [vmem:[%s0 + $0x28] sm:$0x3]
  %v20 = vld [vmem:[%s2] sm:$0xff]
  %v21 = vld [vmem:[%s2 + $0x8] sm:$0xff]
  %v22 = vld [vmem:[%s2 + $0x10] sm:$0xff]
  %v23 = vld [vmem:[%s2 + $0x18] sm:$0xff]
  %v24 = vld [vmem:[%s2 + $0x20] sm:$0xff]
  %v25 = vld [vmem:[%s2 + $0x28] sm:$0xff]
  %v26 = vld [vmem:[%s2 + $0x30] sm:$0xff]
  %v27 = vld [vmem:[%s2 + $0x38] sm:$0xff]
  %v28 = vld [vmem:[%s2 + $0x40] sm:$0xff]
  %v29 = vld [vmem:[%s2 + $0x48] sm:$0xff]
  %v30 = vld [vmem:[%s2 + $0x50] sm:$0xff]
  %v31 = vld [vmem:[%s2 + $0x58] sm:$0xff]
  %v32 = vld [vmem:[%s2 + $0x60] sm:$0xff]
  %v33 = vld [vmem:[%s2 + $0x68] sm:$0xff]
  %v34 = vld [vmem:[%s2 + $0x70] sm:$0xff]
  %v35 = vld [vmem:[%s2 + $0x78] sm:$0xff]
  %v36 = vld [vmem:[%s2 + $0x80] sm:$0xff]
  %v37 = vld [vmem:[%s2 + $0x88] sm:$0xff]
  %v38 = vld [vmem:[%s1] sm:$0xff]
  %v39 = vld [vmem:[%s1 + $0x8] sm:$0xff]
  %v40 = vld [vmem:[%s1 + $0x10] sm:$0x3]
  %42 = vset.pattern.permute.xlu0 0
  %43 = vperm.xlu0 %42, %v38
  %v44 = vpop.permute.xlu0 %43
  %47 = vset.pattern.permute.xlu0 0
  %48 = vperm.xlu0 %47, %v39
  %v49 = vpop.permute.xlu0 %48
  %52 = vset.pattern.permute.xlu0 0
  %53 = vperm.xlu0 %52, %v40
  %v54 = vpop.permute.xlu0 %53
  %vm56 = vcmask 130048
  %v58 = vsel %vm56, %v15, 0
  %v61 = vsel %vm56, %v17, 0
  %v64 = vsel %vm56, %v19, 0
  %66 = vmatprep.subr.mxu0 0.0
  %67 = vmatpush1.msra.mxu0 %v20
  %68 = vmatprep.subr.mxu0 0.0
  %69 = vmatpush1.msra.mxu0 %v21
  %70 = vmatprep.subr.mxu0 0.0
  %71 = vmatpush1.msra.mxu0 %v22
  %72 = vmatprep.subr.mxu0 0.0
  %73 = vmatpush1.msra.mxu0 %v23
  %74 = vmatprep.subr.mxu0 0.0
  %75 = vmatpush1.msra.mxu0 %v24
  %76 = vmatprep.subr.mxu0 0.0
  %77 = vmatpush1.msra.mxu0 %v25
  %78 = vmatprep.subr.mxu0 0.0
  %79 = vmatpush1.msra.mxu0 %v26
  %80 = vmatprep.subr.mxu0 0.0
  %81 = vmatpush1.msra.mxu0 %v27
  %82 = vmatprep.subr.mxu0 0.0
  %83 = vmatpush1.msra.mxu0 %v28
  %84 = vmatprep.subr.mxu0 0.0
  %85 = vmatpush1.msra.mxu0 %v29
  %86 = vmatprep.subr.mxu0 0.0
  %87 = vmatpush1.msra.mxu0 %v30
  %88 = vmatprep.subr.mxu0 0.0
  %89 = vmatpush1.msra.mxu0 %v31
  %90 = vmatprep.subr.mxu0 0.0
  %91 = vmatpush1.msra.mxu0 %v32
  %92 = vmatprep.subr.mxu0 0.0
  %93 = vmatpush1.msra.mxu0 %v33
  %94 = vmatprep.subr.mxu0 0.0
  %95 = vmatpush1.msra.mxu0 %v34
  %96 = vmatprep.subr.mxu0 0.0
  %97 = vmatpush1.msra.mxu0 %v35
  %98 = vmatprep.subr.mxu0 0.0
  %99 = vmatpush1.msra.mxu0 %v36
  %100 = vmatprep.subr.mxu0 0.0
  %101 = vmatpush1.msra.mxu0 %v37
  %102 = vmatprep.subr.mxu0 0.0
  %103 = vmatpush1.msra.mxu0 0.0
  %104 = vmatprep.subr.mxu0 0.0
  %105 = vmatpush1.msra.mxu0 0.0
  %106 = vmatprep.subr.mxu0 0.0
  %107 = vmatpush1.msra.mxu0 0.0
  %108 = vmatprep.subr.mxu0 0.0
  %109 = vmatpush1.msra.mxu0 0.0
  %110 = vmatprep.subr.mxu0 0.0
  %111 = vmatpush1.msra.mxu0 0.0
  %112 = vmatprep.subr.mxu0 0.0
  %113 = vmatpush1.msra.mxu0 0.0
  %114 = vmatprep.subr.mxu0 0.0
  %115 = vmatpush1.msra.mxu0 0.0
  %116 = vmatprep.subr.mxu0 0.0
  %117 = vmatpush1.msra.mxu0 0.0
  %118 = vmatprep.subr.mxu0 0.0
  %119 = vmatpush1.msra.mxu0 0.0
  %120 = vmatprep.subr.mxu0 0.0
  %121 = vmatpush1.msra.mxu0 0.0
  %122 = vmatprep.subr.mxu0 0.0
  %123 = vmatpush1.msra.mxu0 0.0
  %124 = vmatprep.subr.mxu0 0.0
  %125 = vmatpush1.msra.mxu0 0.0
  %126 = vmatprep.subr.mxu0 0.0
  %127 = vmatpush1.msra.mxu0 0.0
  %128 = vmatprep.subr.mxu0 0.0
  %129 = vmatpush1.msra.mxu0 0.0
  %130 = vmatprep.mubr.f32.mxu0 %v58
  %131 = vmatmul.mubr.f32.gmra.mrb[0].mxu0 %v14
  %v132 = vpop.f32.mrb[0].mxu0
  %v133 = vadd.f32 %v44, %v132
  %v134 = vpop.f32.mrb[0].mxu0
  %135 = vmatprep.mubr.f32.mxu0 %v61
  %136 = vmatmul.mubr.f32.gmra.mrb[0].mxu0 %v16
  %v137 = vpop.f32.mrb[0].mxu0
  %v138 = vadd.f32 %v49, %v137
  %v139 = vpop.f32.mrb[0].mxu0
  %140 = vmatprep.mubr.f32.mxu0 %v64
  %141 = vmatmul.mubr.f32.gmra.mrb[0].mxu0 %v18
  %v142 = vpop.f32.mrb[0].mxu0
  %v143 = vadd.f32 %v54, %v142
  %v144 = vpop.f32.mrb[0].mxu0
  %145 = vdwg.mxu0
  %v146 = vmax.f32 %v133, 0.0
  %v147 = vmax.f32 %v138, 0.0
  %v148 = vmax.f32 %v143, 0.0
  %149 = vst [vmem:[%s3] sm:$0xff] %v146
  %150 = vst [vmem:[%s3 + $0x8] sm:$0xff] %v147
  %151 = vst [vmem:[%s3 + $0x10] sm:$0x3] %v148
  // Predicated region
  $region14: #{context_extractor_forward.10} parent=0 // pred_check
    _
  $region15: #{context_extractor_forward.10} parent=0 // pred_check_branch
    %153 = sbr.rel (0) target = $region17
  $region16: #{context_extractor_forward.10} parent=0 // pred_region
    _
  $region17: #{context_extractor_forward.10} parent=0 // pred_fallthru
    _
  // Predicated region
  $region18: #{context_extractor_forward.10} parent=0 // pred_check
    _
  $region19: #{context_extractor_forward.10} parent=0 // pred_check_branch
    %155 = sbr.rel (0) target = $region21
  $region20: #{context_extractor_forward.10} parent=0 // pred_region
    _
  $region21: #{context_extractor_forward.10} parent=0 // pred_fallthru
    _

// kernel: context_extractor_forward.11
$region0: #{context_extractor_forward.11}
  #allocation0 [shape = 'u32[]', space=smem, size = 0x4, offset = 0x4, fixed_abs, tag = 'smem constant byte address 0x4 - core index']
  #allocation1 [shape = 'u32[144,128]{1,0:T(1,128)}', space=vmem, size = 0x12000, scoped, tag = 'internal scratch']
  %s0 = inlined_call_operand.vmem [shape: f32[18,162], index: 0, kind: input, shape index: {}]
  %s1 = inlined_call_operand.vmem [shape: f32[18,1], index: 1, kind: input, shape index: {}]
  %s2 = inlined_call_operand.vmem [shape: f32[162,128], index: 2, kind: input, shape index: {}]
  %s3 = inlined_call_operand.vmem [shape: f32[18,128], index: 3, kind: output, shape index: {}]
  %s4 = sld [smem:[#allocation0]]
  $region22: #{context_extractor_forward.11} parent=0
    _
  %s6 = ssub.s32 1, %s4
  %s7 = scalar_select 0, %s6, %s4
  // Predicated region
  $region2: #{context_extractor_forward.11} parent=0 // pred_check
    _
  $region3: #{context_extractor_forward.11} parent=0 // pred_check_branch
    %9 = sbr.rel (0) target = $region5
  $region4: #{context_extractor_forward.11} parent=0 // pred_region
    _
  $region5: #{context_extractor_forward.11} parent=0 // pred_fallthru
    _
  // Predicated region
  $region6: #{context_extractor_forward.11} parent=0 // pred_check
    _
  $region7: #{context_extractor_forward.11} parent=0 // pred_check_branch
    %11 = sbr.rel (0) target = $region9
  $region8: #{context_extractor_forward.11} parent=0 // pred_region
    _
  $region9: #{context_extractor_forward.11} parent=0 // pred_fallthru
    _
  // Predicated region
  $region10: #{context_extractor_forward.11} parent=0 // pred_check
    _
  $region11: #{context_extractor_forward.11} parent=0 // pred_check_branch
    %13 = sbr.rel (0) target = $region13
  $region12: #{context_extractor_forward.11} parent=0 // pred_region
    _
  $region13: #{context_extractor_forward.11} parent=0 // pred_fallthru
    _
  %v14 = vld [vmem:[%s0] sm:$0xff]
  %v15 = vld [vmem:[%s0 + $0x8] sm:$0xff]
  %v16 = vld [vmem:[%s0 + $0x10] sm:$0xff]
  %v17 = vld [vmem:[%s0 + $0x18] sm:$0xff]
  %v18 = vld [vmem:[%s0 + $0x20] sm:$0x3]
  %v19 = vld [vmem:[%s0 + $0x28] sm:$0x3]
  %v20 = vld [vmem:[%s2] sm:$0xff]
  %v21 = vld [vmem:[%s2 + $0x8] sm:$0xff]
  %v22 = vld [vmem:[%s2 + $0x10] sm:$0xff]
  %v23 = vld [vmem:[%s2 + $0x18] sm:$0xff]
  %v24 = vld [vmem:[%s2 + $0x20] sm:$0xff]
  %v25 = vld [vmem:[%s2 + $0x28] sm:$0xff]
  %v26 = vld [vmem:[%s2 + $0x30] sm:$0xff]
  %v27 = vld [vmem:[%s2 + $0x38] sm:$0xff]
  %v28 = vld [vmem:[%s2 + $0x40] sm:$0xff]
  %v29 = vld [vmem:[%s2 + $0x48] sm:$0xff]
  %v30 = vld [vmem:[%s2 + $0x50] sm:$0xff]
  %v31 = vld [vmem:[%s2 + $0x58] sm:$0xff]
  %v32 = vld [vmem:[%s2 + $0x60] sm:$0xff]
  %v33 = vld [vmem:[%s2 + $0x68] sm:$0xff]
  %v34 = vld [vmem:[%s2 + $0x70] sm:$0xff]
  %v35 = vld [vmem:[%s2 + $0x78] sm:$0xff]
  %v36 = vld [vmem:[%s2 + $0x80] sm:$0xff]
  %v37 = vld [vmem:[%s2 + $0x88] sm:$0xff]
  %v38 = vld [vmem:[%s2 + $0x90] sm:$0xff]
  %v39 = vld [vmem:[%s2 + $0x98] sm:$0xff]
  %v40 = vld [vmem:[%s2 + $0xa0] sm:$0x3]
  %v41 = vld [vmem:[%s1] sm:$0xff]
  %v42 = vld [vmem:[%s1 + $0x8] sm:$0xff]
  %v43 = vld [vmem:[%s1 + $0x10] sm:$0x3]
  %45 = vset.pattern.permute.xlu0 0
  %46 = vperm.xlu0 %45, %v41
  %v47 = vpop.permute.xlu0 %46
  %50 = vset.pattern.permute.xlu0 0
  %51 = vperm.xlu0 %50, %v42
  %v52 = vpop.permute.xlu0 %51
  %55 = vset.pattern.permute.xlu0 0
  %56 = vperm.xlu0 %55, %v43
  %v57 = vpop.permute.xlu0 %56
  %vm59 = vcmask 277504
  %v61 = vsel %vm59, %v15, 0
  %v64 = vsel %vm59, %v17, 0
  %v67 = vsel %vm59, %v19, 0
  %vm69 = vcmask 1041408
  %v71 = vsel %vm69, %v40, 0
  %73 = vmatprep.subr.mxu0 0.0
  %74 = vmatpush1.msra.mxu0 %v20
  %75 = vmatprep.subr.mxu0 0.0
  %76 = vmatpush1.msra.mxu0 %v21
  %77 = vmatprep.subr.mxu0 0.0
  %78 = vmatpush1.msra.mxu0 %v22
  %79 = vmatprep.subr.mxu0 0.0
  %80 = vmatpush1.msra.mxu0 %v23
  %81 = vmatprep.subr.mxu0 0.0
  %82 = vmatpush1.msra.mxu0 %v24
  %83 = vmatprep.subr.mxu0 0.0
  %84 = vmatpush1.msra.mxu0 %v25
  %85 = vmatprep.subr.mxu0 0.0
  %86 = vmatpush1.msra.mxu0 %v26
  %87 = vmatprep.subr.mxu0 0.0
  %88 = vmatpush1.msra.mxu0 %v27
  %89 = vmatprep.subr.mxu0 0.0
  %90 = vmatpush1.msra.mxu0 %v28
  %91 = vmatprep.subr.mxu0 0.0
  %92 = vmatpush1.msra.mxu0 %v29
  %93 = vmatprep.subr.mxu0 0.0
  %94 = vmatpush1.msra.mxu0 %v30
  %95 = vmatprep.subr.mxu0 0.0
  %96 = vmatpush1.msra.mxu0 %v31
  %97 = vmatprep.subr.mxu0 0.0
  %98 = vmatpush1.msra.mxu0 %v32
  %99 = vmatprep.subr.mxu0 0.0
  %100 = vmatpush1.msra.mxu0 %v33
  %101 = vmatprep.subr.mxu0 0.0
  %102 = vmatpush1.msra.mxu0 %v34
  %103 = vmatprep.subr.mxu0 0.0
  %104 = vmatpush1.msra.mxu0 %v35
  %105 = vmatprep.subr.mxu0 0.0
  %106 = vmatpush1.msra.mxu0 %v36
  %107 = vmatprep.subr.mxu0 0.0
  %108 = vmatpush1.msra.mxu0 %v37
  %109 = vmatprep.subr.mxu0 0.0
  %110 = vmatpush1.msra.mxu0 %v38
  %111 = vmatprep.subr.mxu0 0.0
  %112 = vmatpush1.msra.mxu0 %v39
  %113 = vmatprep.subr.mxu0 0.0
  %114 = vmatpush1.msra.mxu0 %v71
  %115 = vmatprep.subr.mxu0 0.0
  %116 = vmatpush1.msra.mxu0 0.0
  %117 = vmatprep.subr.mxu0 0.0
  %118 = vmatpush1.msra.mxu0 0.0
  %119 = vmatprep.subr.mxu0 0.0
  %120 = vmatpush1.msra.mxu0 0.0
  %121 = vmatprep.subr.mxu0 0.0
  %122 = vmatpush1.msra.mxu0 0.0
  %123 = vmatprep.subr.mxu0 0.0
  %124 = vmatpush1.msra.mxu0 0.0
  %125 = vmatprep.subr.mxu0 0.0
  %126 = vmatpush1.msra.mxu0 0.0
  %127 = vmatprep.subr.mxu0 0.0
  %128 = vmatpush1.msra.mxu0 0.0
  %129 = vmatprep.subr.mxu0 0.0
  %130 = vmatpush1.msra.mxu0 0.0
  %131 = vmatprep.subr.mxu0 0.0
  %132 = vmatpush1.msra.mxu0 0.0
  %133 = vmatprep.subr.mxu0 0.0
  %134 = vmatpush1.msra.mxu0 0.0
  %135 = vmatprep.subr.mxu0 0.0
  %136 = vmatpush1.msra.mxu0 0.0
  %137 = vmatprep.mubr.f32.mxu0 %v61
  %138 = vmatmul.mubr.f32.gmra.mrb[0].mxu0 %v14
  %v139 = vpop.f32.mrb[0].mxu0
  %v140 = vadd.f32 %v47, %v139
  %v141 = vpop.f32.mrb[0].mxu0
  %142 = vmatprep.mubr.f32.mxu0 %v64
  %143 = vmatmul.mubr.f32.gmra.mrb[0].mxu0 %v16
  %v144 = vpop.f32.mrb[0].mxu0
  %v145 = vadd.f32 %v52, %v144
  %v146 = vpop.f32.mrb[0].mxu0
  %147 = vmatprep.mubr.f32.mxu0 %v67
  %148 = vmatmul.mubr.f32.gmra.mrb[0].mxu0 %v18
  %v149 = vpop.f32.mrb[0].mxu0
  %v150 = vadd.f32 %v57, %v149
  %v151 = vpop.f32.mrb[0].mxu0
  %152 = vdwg.mxu0
  %v153 = vmax.f32 %v140, 0.0
  %v154 = vmax.f32 %v145, 0.0
  %v155 = vmax.f32 %v150, 0.0
  %156 = vst [vmem:[%s3] sm:$0xff] %v153
  %157 = vst [vmem:[%s3 + $0x8] sm:$0xff] %v154
  %158 = vst [vmem:[%s3 + $0x10] sm:$0x3] %v155
  // Predicated region
  $region14: #{context_extractor_forward.11} parent=0 // pred_check
    _
  $region15: #{context_extractor_forward.11} parent=0 // pred_check_branch
    %160 = sbr.rel (0) target = $region17
  $region16: #{context_extractor_forward.11} parent=0 // pred_region
    _
  $region17: #{context_extractor_forward.11} parent=0 // pred_fallthru
    _
  // Predicated region
  $region18: #{context_extractor_forward.11} parent=0 // pred_check
    _
  $region19: #{context_extractor_forward.11} parent=0 // pred_check_branch
    %162 = sbr.rel (0) target = $region21
  $region20: #{context_extractor_forward.11} parent=0 // pred_region
    _
  $region21: #{context_extractor_forward.11} parent=0 // pred_fallthru
    _

// kernel: context_extractor_forward.12
$region0: #{context_extractor_forward.12}
  #allocation0 [shape = 'u32[]', space=smem, size = 0x4, offset = 0x4, fixed_abs, tag = 'smem constant byte address 0x4 - core index']
  #allocation1 [shape = 'u32[144,128]{1,0:T(1,128)}', space=vmem, size = 0x12000, scoped, tag = 'internal scratch']
  %s0 = inlined_call_operand.vmem [shape: f32[20,162], index: 0, kind: input, shape index: {}]
  %s1 = inlined_call_operand.vmem [shape: f32[20,1], index: 1, kind: input, shape index: {}]
  %s2 = inlined_call_operand.vmem [shape: f32[162,32], index: 2, kind: input, shape index: {}]
  %s3 = inlined_call_operand.vmem [shape: f32[20,32], index: 3, kind: output, shape index: {}]
  %s4 = sld [smem:[#allocation0]]
  $region22: #{context_extractor_forward.12} parent=0
    _
  %s6 = ssub.s32 1, %s4
  %s7 = scalar_select 0, %s6, %s4
  // Predicated region
  $region2: #{context_extractor_forward.12} parent=0 // pred_check
    _
  $region3: #{context_extractor_forward.12} parent=0 // pred_check_branch
    %9 = sbr.rel (0) target = $region5
  $region4: #{context_extractor_forward.12} parent=0 // pred_region
    _
  $region5: #{context_extractor_forward.12} parent=0 // pred_fallthru
    _
  // Predicated region
  $region6: #{context_extractor_forward.12} parent=0 // pred_check
    _
  $region7: #{context_extractor_forward.12} parent=0 // pred_check_branch
    %11 = sbr.rel (0) target = $region9
  $region8: #{context_extractor_forward.12} parent=0 // pred_region
    _
  $region9: #{context_extractor_forward.12} parent=0 // pred_fallthru
    _
  // Predicated region
  $region10: #{context_extractor_forward.12} parent=0 // pred_check
    _
  $region11: #{context_extractor_forward.12} parent=0 // pred_check_branch
    %13 = sbr.rel (0) target = $region13
  $region12: #{context_extractor_forward.12} parent=0 // pred_region
    _
  $region13: #{context_extractor_forward.12} parent=0 // pred_fallthru
    _
  %v14 = vld [vmem:[%s0] sm:$0xff]
  %v15 = vld [vmem:[%s0 + $0x8] sm:$0xff]
  %v16 = vld [vmem:[%s0 + $0x10] sm:$0xff]
  %v17 = vld [vmem:[%s0 + $0x18] sm:$0xff]
  %v18 = vld [vmem:[%s0 + $0x20] sm:$0xf]
  %v19 = vld [vmem:[%s0 + $0x28] sm:$0xf]
  %v20 = vld [vmem:[%s2] sm:$0xff]
  %v21 = vld [vmem:[%s2 + $0x8] sm:$0xff]
  %v22 = vld [vmem:[%s2 + $0x10] sm:$0xff]
  %v23 = vld [vmem:[%s2 + $0x18] sm:$0xff]
  %v24 = vld [vmem:[%s2 + $0x20] sm:$0xff]
  %v25 = vld [vmem:[%s2 + $0x28] sm:$0xff]
  %v26 = vld [vmem:[%s2 + $0x30] sm:$0xff]
  %v27 = vld [vmem:[%s2 + $0x38] sm:$0xff]
  %v28 = vld [vmem:[%s2 + $0x40] sm:$0xff]
  %v29 = vld [vmem:[%s2 + $0x48] sm:$0xff]
  %v30 = vld [vmem:[%s2 + $0x50] sm:$0xff]
  %v31 = vld [vmem:[%s2 + $0x58] sm:$0xff]
  %v32 = vld [vmem:[%s2 + $0x60] sm:$0xff]
  %v33 = vld [vmem:[%s2 + $0x68] sm:$0xff]
  %v34 = vld [vmem:[%s2 + $0x70] sm:$0xff]
  %v35 = vld [vmem:[%s2 + $0x78] sm:$0xff]
  %v36 = vld [vmem:[%s2 + $0x80] sm:$0xff]
  %v37 = vld [vmem:[%s2 + $0x88] sm:$0xff]
  %v38 = vld [vmem:[%s2 + $0x90] sm:$0xff]
  %v39 = vld [vmem:[%s2 + $0x98] sm:$0xff]
  %v40 = vld [vmem:[%s2 + $0xa0] sm:$0x3]
  %v41 = vld [vmem:[%s1] sm:$0xff]
  %v42 = vld [vmem:[%s1 + $0x8] sm:$0xff]
  %v43 = vld [vmem:[%s1 + $0x10] sm:$0xf]
  %45 = vset.pattern.permute.xlu0 0
  %46 = vperm.xlu0 %45, %v41
  %v47 = vpop.permute.xlu0 %46
  %50 = vset.pattern.permute.xlu0 0
  %51 = vperm.xlu0 %50, %v42
  %v52 = vpop.permute.xlu0 %51
  %55 = vset.pattern.permute.xlu0 0
  %56 = vperm.xlu0 %55, %v43
  %v57 = vpop.permute.xlu0 %56
  %vm59 = vcmask 277504
  %v61 = vsel %vm59, %v15, 0
  %v64 = vsel %vm59, %v17, 0
  %v67 = vsel %vm59, %v19, 0
  %vm69 = vcmask 1041408
  %v71 = vsel %vm69, %v40, 0
  %73 = vmatprep.subr.mxu0 0.0
  %74 = vmatpush1.msra.mxu0 %v20
  %75 = vmatprep.subr.mxu0 0.0
  %76 = vmatpush1.msra.mxu0 %v21
  %77 = vmatprep.subr.mxu0 0.0
  %78 = vmatpush1.msra.mxu0 %v22
  %79 = vmatprep.subr.mxu0 0.0
  %80 = vmatpush1.msra.mxu0 %v23
  %81 = vmatprep.subr.mxu0 0.0
  %82 = vmatpush1.msra.mxu0 %v24
  %83 = vmatprep.subr.mxu0 0.0
  %84 = vmatpush1.msra.mxu0 %v25
  %85 = vmatprep.subr.mxu0 0.0
  %86 = vmatpush1.msra.mxu0 %v26
  %87 = vmatprep.subr.mxu0 0.0
  %88 = vmatpush1.msra.mxu0 %v27
  %89 = vmatprep.subr.mxu0 0.0
  %90 = vmatpush1.msra.mxu0 %v28
  %91 = vmatprep.subr.mxu0 0.0
  %92 = vmatpush1.msra.mxu0 %v29
  %93 = vmatprep.subr.mxu0 0.0
  %94 = vmatpush1.msra.mxu0 %v30
  %95 = vmatprep.subr.mxu0 0.0
  %96 = vmatpush1.msra.mxu0 %v31
  %97 = vmatprep.subr.mxu0 0.0
  %98 = vmatpush1.msra.mxu0 %v32
  %99 = vmatprep.subr.mxu0 0.0
  %100 = vmatpush1.msra.mxu0 %v33
  %101 = vmatprep.subr.mxu0 0.0
  %102 = vmatpush1.msra.mxu0 %v34
  %103 = vmatprep.subr.mxu0 0.0
  %104 = vmatpush1.msra.mxu0 %v35
  %105 = vmatprep.subr.mxu0 0.0
  %106 = vmatpush1.msra.mxu0 %v36
  %107 = vmatprep.subr.mxu0 0.0
  %108 = vmatpush1.msra.mxu0 %v37
  %109 = vmatprep.subr.mxu0 0.0
  %110 = vmatpush1.msra.mxu0 %v38
  %111 = vmatprep.subr.mxu0 0.0
  %112 = vmatpush1.msra.mxu0 %v39
  %113 = vmatprep.subr.mxu0 0.0
  %114 = vmatpush1.msra.mxu0 %v71
  %115 = vmatprep.subr.mxu0 0.0
  %116 = vmatpush1.msra.mxu0 0.0
  %117 = vmatprep.subr.mxu0 0.0
  %118 = vmatpush1.msra.mxu0 0.0
  %119 = vmatprep.subr.mxu0 0.0
  %120 = vmatpush1.msra.mxu0 0.0
  %121 = vmatprep.subr.mxu0 0.0
  %122 = vmatpush1.msra.mxu0 0.0
  %123 = vmatprep.subr.mxu0 0.0
  %124 = vmatpush1.msra.mxu0 0.0
  %125 = vmatprep.subr.mxu0 0.0
  %126 = vmatpush1.msra.mxu0 0.0
  %127 = vmatprep.subr.mxu0 0.0
  %128 = vmatpush1.msra.mxu0 0.0
  %129 = vmatprep.subr.mxu0 0.0
  %130 = vmatpush1.msra.mxu0 0.0
  %131 = vmatprep.subr.mxu0 0.0
  %132 = vmatpush1.msra.mxu0 0.0
  %133 = vmatprep.subr.mxu0 0.0
  %134 = vmatpush1.msra.mxu0 0.0
  %135 = vmatprep.subr.mxu0 0.0
  %136 = vmatpush1.msra.mxu0 0.0
  %137 = vmatprep.mubr.f32.mxu0 %v61
  %138 = vmatmul.mubr.f32.gmra.mrb[0].mxu0 %v14
  %v139 = vpop.f32.mrb[0].mxu0
  %v140 = vadd.f32 %v47, %v139
  %v141 = vpop.f32.mrb[0].mxu0
  %142 = vmatprep.mubr.f32.mxu0 %v64
  %143 = vmatmul.mubr.f32.gmra.mrb[0].mxu0 %v16
  %v144 = vpop.f32.mrb[0].mxu0
  %v145 = vadd.f32 %v52, %v144
  %v146 = vpop.f32.mrb[0].mxu0
  %147 = vmatprep.mubr.f32.mxu0 %v67
  %148 = vmatmul.mubr.f32.gmra.mrb[0].mxu0 %v18
  %v149 = vpop.f32.mrb[0].mxu0
  %v150 = vadd.f32 %v57, %v149
  %v151 = vpop.f32.mrb[0].mxu0
  %152 = vdwg.mxu0
  %v153 = vmax.f32 %v140, 0.0
  %v154 = vmax.f32 %v145, 0.0
  %v155 = vmax.f32 %v150, 0.0
  %vm156 = vcmask 261120
  %157 = vst.msk [vmem:[%s3] sm:$0xff] %vm156, %v153
  %158 = vst.msk [vmem:[%s3 + $0x8] sm:$0xff] %vm156, %v154
  %vm159 = vcmask 257024
  %160 = vst.msk [vmem:[%s3 + $0x10] sm:$0xf] %vm159, %v155
  // Predicated region
  $region14: #{context_extractor_forward.12} parent=0 // pred_check
    _
  $region15: #{context_extractor_forward.12} parent=0 // pred_check_branch
    %162 = sbr.rel (0) target = $region17
  $region16: #{context_extractor_forward.12} parent=0 // pred_region
    _
  $region17: #{context_extractor_forward.12} parent=0 // pred_fallthru
    _
  // Predicated region
  $region18: #{context_extractor_forward.12} parent=0 // pred_check
    _
  $region19: #{context_extractor_forward.12} parent=0 // pred_check_branch
    %164 = sbr.rel (0) target = $region21
  $region20: #{context_extractor_forward.12} parent=0 // pred_region
    _
  $region21: #{context_extractor_forward.12} parent=0 // pred_fallthru
    _

// kernel: context_extractor_forward.13
$region0: #{context_extractor_forward.13}
  #allocation0 [shape = 'u32[]', space=smem, size = 0x4, offset = 0x4, fixed_abs, tag = 'smem constant byte address 0x4 - core index']
  #allocation1 [shape = 'u32[144,128]{1,0:T(1,128)}', space=vmem, size = 0x12000, scoped, tag = 'internal scratch']
  %s0 = inlined_call_operand.vmem [shape: f32[20,180], index: 0, kind: input, shape index: {}]
  %s1 = inlined_call_operand.vmem [shape: f32[20,1], index: 1, kind: input, shape index: {}]
  %s2 = inlined_call_operand.vmem [shape: f32[180,32], index: 2, kind: input, shape index: {}]
  %s3 = inlined_call_operand.vmem [shape: f32[20,32], index: 3, kind: output, shape index: {}]
  %s4 = sld [smem:[#allocation0]]
  $region22: #{context_extractor_forward.13} parent=0
    _
  %s6 = ssub.s32 1, %s4
  %s7 = scalar_select 0, %s6, %s4
  // Predicated region
  $region2: #{context_extractor_forward.13} parent=0 // pred_check
    _
  $region3: #{context_extractor_forward.13} parent=0 // pred_check_branch
    %9 = sbr.rel (0) target = $region5
  $region4: #{context_extractor_forward.13} parent=0 // pred_region
    _
  $region5: #{context_extractor_forward.13} parent=0 // pred_fallthru
    _
  // Predicated region
  $region6: #{context_extractor_forward.13} parent=0 // pred_check
    _
  $region7: #{context_extractor_forward.13} parent=0 // pred_check_branch
    %11 = sbr.rel (0) target = $region9
  $region8: #{context_extractor_forward.13} parent=0 // pred_region
    _
  $region9: #{context_extractor_forward.13} parent=0 // pred_fallthru
    _
  // Predicated region
  $region10: #{context_extractor_forward.13} parent=0 // pred_check
    _
  $region11: #{context_extractor_forward.13} parent=0 // pred_check_branch
    %13 = sbr.rel (0) target = $region13
  $region12: #{context_extractor_forward.13} parent=0 // pred_region
    _
  $region13: #{context_extractor_forward.13} parent=0 // pred_fallthru
    _
  %v14 = vld [vmem:[%s0] sm:$0xff]
  %v15 = vld [vmem:[%s0 + $0x8] sm:$0xff]
  %v16 = vld [vmem:[%s0 + $0x10] sm:$0xff]
  %v17 = vld [vmem:[%s0 + $0x18] sm:$0xff]
  %v18 = vld [vmem:[%s0 + $0x20] sm:$0xf]
  %v19 = vld [vmem:[%s0 + $0x28] sm:$0xf]
  %v20 = vld [vmem:[%s2] sm:$0xff]
  %v21 = vld [vmem:[%s2 + $0x8] sm:$0xff]
  %v22 = vld [vmem:[%s2 + $0x10] sm:$0xff]
  %v23 = vld [vmem:[%s2 + $0x18] sm:$0xff]
  %v24 = vld [vmem:[%s2 + $0x20] sm:$0xff]
  %v25 = vld [vmem:[%s2 + $0x28] sm:$0xff]
  %v26 = vld [vmem:[%s2 + $0x30] sm:$0xff]
  %v27 = vld [vmem:[%s2 + $0x38] sm:$0xff]
  %v28 = vld [vmem:[%s2 + $0x40] sm:$0xff]
  %v29 = vld [vmem:[%s2 + $0x48] sm:$0xff]
  %v30 = vld [vmem:[%s2 + $0x50] sm:$0xff]
  %v31 = vld [vmem:[%s2 + $0x58] sm:$0xff]
  %v32 = vld [vmem:[%s2 + $0x60] sm:$0xff]
  %v33 = vld [vmem:[%s2 + $0x68] sm:$0xff]
  %v34 = vld [vmem:[%s2 + $0x70] sm:$0xff]
  %v35 = vld [vmem:[%s2 + $0x78] sm:$0xff]
  %v36 = vld [vmem:[%s2 + $0x80] sm:$0xff]
  %v37 = vld [vmem:[%s2 + $0x88] sm:$0xff]
  %v38 = vld [vmem:[%s2 + $0x90] sm:$0xff]
  %v39 = vld [vmem:[%s2 + $0x98] sm:$0xff]
  %v40 = vld [vmem:[%s2 + $0xa0] sm:$0xff]
  %v41 = vld [vmem:[%s2 + $0xa8] sm:$0xff]
  %v42 = vld [vmem:[%s2 + $0xb0] sm:$0xf]
  %v43 = vld [vmem:[%s1] sm:$0xff]
  %v44 = vld [vmem:[%s1 + $0x8] sm:$0xff]
  %v45 = vld [vmem:[%s1 + $0x10] sm:$0xf]
  %47 = vset.pattern.permute.xlu0 0
  %48 = vperm.xlu0 %47, %v43
  %v49 = vpop.permute.xlu0 %48
  %52 = vset.pattern.permute.xlu0 0
  %53 = vperm.xlu0 %52, %v44
  %v54 = vpop.permute.xlu0 %53
  %57 = vset.pattern.permute.xlu0 0
  %58 = vperm.xlu0 %57, %v45
  %v59 = vpop.permute.xlu0 %58
  %vm61 = vcmask 424960
  %v63 = vsel %vm61, %v15, 0
  %v66 = vsel %vm61, %v17, 0
  %v69 = vsel %vm61, %v19, 0
  %vm71 = vcmask 1043456
  %v73 = vsel %vm71, %v42, 0
  %75 = vmatprep.subr.mxu0 0.0
  %76 = vmatpush1.msra.mxu0 %v20
  %77 = vmatprep.subr.mxu0 0.0
  %78 = vmatpush1.msra.mxu0 %v21
  %79 = vmatprep.subr.mxu0 0.0
  %80 = vmatpush1.msra.mxu0 %v22
  %81 = vmatprep.subr.mxu0 0.0
  %82 = vmatpush1.msra.mxu0 %v23
  %83 = vmatprep.subr.mxu0 0.0
  %84 = vmatpush1.msra.mxu0 %v24
  %85 = vmatprep.subr.mxu0 0.0
  %86 = vmatpush1.msra.mxu0 %v25
  %87 = vmatprep.subr.mxu0 0.0
  %88 = vmatpush1.msra.mxu0 %v26
  %89 = vmatprep.subr.mxu0 0.0
  %90 = vmatpush1.msra.mxu0 %v27
  %91 = vmatprep.subr.mxu0 0.0
  %92 = vmatpush1.msra.mxu0 %v28
  %93 = vmatprep.subr.mxu0 0.0
  %94 = vmatpush1.msra.mxu0 %v29
  %95 = vmatprep.subr.mxu0 0.0
  %96 = vmatpush1.msra.mxu0 %v30
  %97 = vmatprep.subr.mxu0 0.0
  %98 = vmatpush1.msra.mxu0 %v31
  %99 = vmatprep.subr.mxu0 0.0
  %100 = vmatpush1.msra.mxu0 %v32
  %101 = vmatprep.subr.mxu0 0.0
  %102 = vmatpush1.msra.mxu0 %v33
  %103 = vmatprep.subr.mxu0 0.0
  %104 = vmatpush1.msra.mxu0 %v34
  %105 = vmatprep.subr.mxu0 0.0
  %106 = vmatpush1.msra.mxu0 %v35
  %107 = vmatprep.subr.mxu0 0.0
  %108 = vmatpush1.msra.mxu0 %v36
  %109 = vmatprep.subr.mxu0 0.0
  %110 = vmatpush1.msra.mxu0 %v37
  %111 = vmatprep.subr.mxu0 0.0
  %112 = vmatpush1.msra.mxu0 %v38
  %113 = vmatprep.subr.mxu0 0.0
  %114 = vmatpush1.msra.mxu0 %v39
  %115 = vmatprep.subr.mxu0 0.0
  %116 = vmatpush1.msra.mxu0 %v40
  %117 = vmatprep.subr.mxu0 0.0
  %118 = vmatpush1.msra.mxu0 %v41
  %119 = vmatprep.subr.mxu0 0.0
  %120 = vmatpush1.msra.mxu0 %v73
  %121 = vmatprep.subr.mxu0 0.0
  %122 = vmatpush1.msra.mxu0 0.0
  %123 = vmatprep.subr.mxu0 0.0
  %124 = vmatpush1.msra.mxu0 0.0
  %125 = vmatprep.subr.mxu0 0.0
  %126 = vmatpush1.msra.mxu0 0.0
  %127 = vmatprep.subr.mxu0 0.0
  %128 = vmatpush1.msra.mxu0 0.0
  %129 = vmatprep.subr.mxu0 0.0
  %130 = vmatpush1.msra.mxu0 0.0
  %131 = vmatprep.subr.mxu0 0.0
  %132 = vmatpush1.msra.mxu0 0.0
  %133 = vmatprep.subr.mxu0 0.0
  %134 = vmatpush1.msra.mxu0 0.0
  %135 = vmatprep.subr.mxu0 0.0
  %136 = vmatpush1.msra.mxu0 0.0
  %137 = vmatprep.subr.mxu0 0.0
  %138 = vmatpush1.msra.mxu0 0.0
  %139 = vmatprep.mubr.f32.mxu0 %v63
  %140 = vmatmul.mubr.f32.gmra.mrb[0].mxu0 %v14
  %v141 = vpop.f32.mrb[0].mxu0
  %v142 = vadd.f32 %v49, %v141
  %v143 = vpop.f32.mrb[0].mxu0
  %144 = vmatprep.mubr.f32.mxu0 %v66
  %145 = vmatmul.mubr.f32.gmra.mrb[0].mxu0 %v16
  %v146 = vpop.f32.mrb[0].mxu0
  %v147 = vadd.f32 %v54, %v146
  %v148 = vpop.f32.mrb[0].mxu0
  %149 = vmatprep.mubr.f32.mxu0 %v69
  %150 = vmatmul.mubr.f32.gmra.mrb[0].mxu0 %v18
  %v151 = vpop.f32.mrb[0].mxu0
  %v152 = vadd.f32 %v59, %v151
  %v153 = vpop.f32.mrb[0].mxu0
  %154 = vdwg.mxu0
  %v155 = vmax.f32 %v142, 0.0
  %v156 = vmax.f32 %v147, 0.0
  %v157 = vmax.f32 %v152, 0.0
  %vm158 = vcmask 261120
  %159 = vst.msk [vmem:[%s3] sm:$0xff] %vm158, %v155
  %160 = vst.msk [vmem:[%s3 + $0x8] sm:$0xff] %vm158, %v156
  %vm161 = vcmask 257024
  %162 = vst.msk [vmem:[%s3 + $0x10] sm:$0xf] %vm161, %v157
  // Predicated region
  $region14: #{context_extractor_forward.13} parent=0 // pred_check
    _
  $region15: #{context_extractor_forward.13} parent=0 // pred_check_branch
    %164 = sbr.rel (0) target = $region17
  $region16: #{context_extractor_forward.13} parent=0 // pred_region
    _
  $region17: #{context_extractor_forward.13} parent=0 // pred_fallthru
    _
  // Predicated region
  $region18: #{context_extractor_forward.13} parent=0 // pred_check
    _
  $region19: #{context_extractor_forward.13} parent=0 // pred_check_branch
    %166 = sbr.rel (0) target = $region21
  $region20: #{context_extractor_forward.13} parent=0 // pred_region
    _
  $region21: #{context_extractor_forward.13} parent=0 // pred_fallthru
    _

</llo_original>
